<compile_context>
chip_gen: v6e
topology: v6e:2x2x1
jax: 0.10.0
libtpu: 0.0.40
codegen_flags: <defaults>
</compile_context>

<pallas_src>
import functools

import jax
import jax.numpy as jnp
from jax import lax
from jax.experimental import pallas as pl
from jax.experimental.pallas import tpu as pltpu


# ---------------------------------------------------------------------------
# Pallas kernel: one fused input projection -> unrolled multi-chain LSTM
#                -> sum pooling -> MLP head -> log_softmax
# ---------------------------------------------------------------------------
def lstm_classifier_kernel(x_ref, w_cat_ref, b_gate_ref, w_hh_ref,
                           w1_ref, b1_ref, w2_ref, b2_ref,
                           out_ref, *, n_nodes, num_chains):
    x = x_ref[...]                                     # [N*tb, 2F] time-major flat
    w_hh = w_hh_ref[...]                               # [H, 4H]

    hidden = w_hh.shape[0]
    tb = x.shape[0] // n_nodes
    rows = tb // num_chains                            # rows per independent chain

    # Single hoisted, embedding-folded input projection over all (node, graph)
    # rows: one MXU matmul (K = 2F) before the serial recurrence.
    gates_x = (jnp.dot(x, w_cat_ref[...], preferred_element_type=jnp.float32)
               + b_gate_ref[...])                      # [N*tb, 4H]

    # Independent sub-chain state (separate h/c/acc per chain) so the LLO
    # scheduler can overlap chain A's MXU matmul with chain B's EUP work.
    hs = [jnp.zeros((rows, hidden), jnp.float32) for _ in range(num_chains)]
    cs = [jnp.zeros((rows, hidden), jnp.float32) for _ in range(num_chains)]
    accs = [jnp.zeros((rows, hidden), jnp.float32) for _ in range(num_chains)]

    # Statically unrolled recurrence (n_nodes is small and static).
    for t in range(n_nodes):
        for ci in range(num_chains):
            base = t * tb + ci * rows                  # static contiguous slice
            g_x = gates_x[base:base + rows, :]
            gates = g_x + jnp.dot(hs[ci], w_hh,
                                  preferred_element_type=jnp.float32)  # [rows, 4H]
            # PyTorch LSTM gate order: i, f, g, o. One sigmoid over all 4H
            # lanes (i/f/o slices taken from it), one tanh on the g slice.
            sig = jax.nn.sigmoid(gates)
            g_cand = jnp.tanh(gates[:, 2 * hidden:3 * hidden])
            i_g = sig[:, 0:hidden]
            f_g = sig[:, hidden:2 * hidden]
            o_g = sig[:, 3 * hidden:4 * hidden]
            cs[ci] = f_g * cs[ci] + i_g * g_cand
            hs[ci] = o_g * jnp.tanh(cs[ci])
            accs[ci] = accs[ci] + hs[ci]               # sum over time (pooling)

    acc = accs[0] if num_chains == 1 else jnp.concatenate(accs, axis=0)  # [tb, H]

    # MLP head: Linear -> ReLU -> Linear -> log_softmax
    h1 = jnp.maximum(
        jnp.dot(acc, w1_ref[...], preferred_element_type=jnp.float32) + b1_ref[...],
        0.0)
    logits = jnp.dot(h1, w2_ref[...], preferred_element_type=jnp.float32) + b2_ref[...]
    m = jnp.max(logits, axis=1, keepdims=True)
    z = logits - m
    lse = jnp.log(jnp.sum(jnp.exp(z), axis=1, keepdims=True))
    out_ref[...] = z - lse                             # log-probabilities [tb, C]


# ---------------------------------------------------------------------------
# Generation-dependent tiling: split the batch across cores only on v7x
# ---------------------------------------------------------------------------
def _num_tensorcores_per_chip():
    try:
        kind = jax.devices()[0].device_kind.lower()
    except Exception:
        return 1
    # v7x has 2 TensorCores per chip; v5e / v6e have 1.
    return 2 if ("v7" in kind or "7x" in kind) else 1


def _choose_tiling(batch):
    tb = batch
    if (_num_tensorcores_per_chip() >= 2
            and batch % 2 == 0 and (batch // 2) % 8 == 0):
        tb = batch // 2                                # 2-wide parallel grid on v7x
    # Two interleaved sub-chains when each still has >= 8 (sublane-aligned) rows.
    num_chains = 2 if tb % 16 == 0 else 1
    return tb, num_chains


# ---------------------------------------------------------------------------
# Wrapper: fold embedding into the LSTM input projection, flatten time-major
# blocks in XLA, launch one Pallas call over the batch grid.
# ---------------------------------------------------------------------------
def lstm_classifier_forward(node_feat, nbr_feat, params, num_class):
    tb, num_chains = _choose_tiling(node_feat.shape[0])
    return _forward_jit(node_feat, nbr_feat, params, num_class, tb, num_chains)


@functools.partial(jax.jit, static_argnames=("num_class", "tb", "num_chains"))
def _forward_jit(node_feat, nbr_feat, params, num_class, tb, num_chains):
    B, N, F = node_feat.shape
    E = params["w_emb"].shape[1]

    # Fold the shared embedding Linear into the LSTM input projection:
    #   (x @ W_emb + b_emb) @ W_ih_part == x @ (W_emb @ W_ih_part) + b_emb @ W_ih_part
    # and stack node/nbr halves into ONE [2F, 4H] weight.
    w_ih_node = params["w_ih"][:E]                     # [E, 4H]
    w_ih_nbr = params["w_ih"][E:]                      # [E, 4H]
    w_cat = jnp.concatenate([params["w_emb"] @ w_ih_node,
                             params["w_emb"] @ w_ih_nbr], axis=0)   # [2F, 4H]
    b_gate = (params["b_emb"] @ w_ih_node + params["b_emb"] @ w_ih_nbr
              + params["b_ih"] + params["b_hh"])       # [1, 4H]

    # Concatenate node/nbr features and flatten to a time-major, per-batch-block
    # 2-D slab in XLA (fused with the transpose) so the kernel does no reshapes.
    x = jnp.concatenate([node_feat, nbr_feat], axis=-1)        # [B, N, 2F]
    x_tm = jnp.transpose(x, (1, 0, 2))                         # [N, B, 2F]
    num_blocks = B // tb
    x_flat = (x_tm.reshape(N, num_blocks, tb, 2 * F)
              .transpose(1, 0, 2, 3)
              .reshape(num_blocks * N * tb, 2 * F))            # [blocks*N*tb, 2F]

    def _full_spec(arr):
        nd = arr.ndim
        return pl.BlockSpec(arr.shape, lambda i, _nd=nd: (0,) * _nd)

    kernel = functools.partial(lstm_classifier_kernel,
                               n_nodes=N, num_chains=num_chains)

    return pl.pallas_call(
        kernel,
        out_shape=jax.ShapeDtypeStruct((B, num_class), jnp.float32),
        grid=(num_blocks,),
        in_specs=[
            pl.BlockSpec((N * tb, 2 * F), lambda i: (i, 0)),
            _full_spec(w_cat), _full_spec(b_gate), _full_spec(params["w_hh"]),
            _full_spec(params["w1"]), _full_spec(params["b1"]),
            _full_spec(params["w2"]), _full_spec(params["b2"]),
        ],
        out_specs=pl.BlockSpec((tb, num_class), lambda i: (i, 0)),
        compiler_params=pltpu.CompilerParams(dimension_semantics=("parallel",)),
    )(x_flat, w_cat, b_gate, params["w_hh"],
      params["w1"], params["b1"], params["w2"], params["b2"])


# ---------------------------------------------------------------------------
# Pure-JAX reference (unfolded math) for a tolerance check
# ---------------------------------------------------------------------------
def reference_forward(node_feat, nbr_feat, params):
    node_emb = node_feat @ params["w_emb"] + params["b_emb"]     # [B, N, E]
    nbr_emb = nbr_feat @ params["w_emb"] + params["b_emb"]       # [B, N, E]
    x = jnp.concatenate([node_emb, nbr_emb], axis=-1)            # [B, N, 2E]
    H = params["w_hh"].shape[0]
    B = x.shape[0]

    def cell(carry, x_t):
        h, c = carry
        gates = (x_t @ params["w_ih"] + h @ params["w_hh"]
                 + params["b_ih"] + params["b_hh"])
        i = jax.nn.sigmoid(gates[:, :H])
        f = jax.nn.sigmoid(gates[:, H:2 * H])
        g = jnp.tanh(gates[:, 2 * H:3 * H])
        o = jax.nn.sigmoid(gates[:, 3 * H:])
        c = f * c + i * g
        h = o * jnp.tanh(c)
        return (h, c), h

    init = (jnp.zeros((B, H), jnp.float32), jnp.zeros((B, H), jnp.float32))
    _, hs = lax.scan(cell, init, jnp.swapaxes(x, 0, 1))          # [N, B, H]
    embed = hs.sum(axis=0)                                       # [B, H]
    h1 = jnp.maximum(embed @ params["w1"] + params["b1"], 0.0)
    logits = h1 @ params["w2"] + params["b2"]
    return jax.nn.log_softmax(logits, axis=-1)


def make_params(key, feat_dim, emb, hidden, mlp_hidden, num_class):
    """Deterministic PyTorch-style uniform(-1/sqrt(fan), 1/sqrt(fan)) init."""
    ks = jax.random.split(key, 12)

    def u(k, shape, fan):
        bound = 1.0 / jnp.sqrt(jnp.float32(fan))
        return jax.random.uniform(k, shape, jnp.float32, -bound, bound)

    return {
        # nn.Linear(feat_dim, emb)  (stored transposed: [in, out])
        "w_emb": u(ks[0], (feat_dim, emb), feat_dim),
        "b_emb": u(ks[1], (1, emb), feat_dim),
        # nn.LSTM(2*emb, hidden): weight_ih [4H, 2E] -> stored [2E, 4H], etc.
        "w_ih": u(ks[2], (2 * emb, 4 * hidden), hidden),
        "w_hh": u(ks[3], (hidden, 4 * hidden), hidden),
        "b_ih": u(ks[4], (1, 4 * hidden), hidden),
        "b_hh": u(ks[5], (1, 4 * hidden), hidden),
        # MLP head
        "w1": u(ks[6], (hidden, mlp_hidden), hidden),
        "b1": u(ks[7], (1, mlp_hidden), hidden),
        "w2": u(ks[8], (mlp_hidden, num_class), mlp_hidden),
        "b2": u(ks[9], (1, num_class), mlp_hidden),
    }


if __name__ == "__main__":
    # Small, forward-consistent sizes. B=16 graphs: grid=(1,) with two 8-row
    # sub-chains on v5e/v6e; grid=(2,) parallel with one 8-row chain on v7x.
    batch_graphs = 16
    num_nodes = 8
    feat_dim = 16
    embedding_size = 8
    hidden_size = 32      # -> gate width 4H = 128 (lane-aligned)
    mlp_hidden = 16
    num_class = 4

    key = jax.random.PRNGKey(0)
    k_tags, k_nbr, k_params = jax.random.split(key, 3)

    # Synthetic graphs: node tags + neighbor-tag multisets (data prep, plain JAX).
    node_tags = jax.random.randint(k_tags, (batch_graphs, num_nodes), 0, feat_dim)
    node_feat = jax.nn.one_hot(node_tags, feat_dim, dtype=jnp.float32)      # scatter_(1, tags, 1)

    # neighbor1_feat[b, i, j] = count of tag j among neighbors of node i of graph b
    nbr_tags = jax.random.randint(k_nbr, (batch_graphs, num_nodes, 3), 0, feat_dim)
    neighbor1_feat = jax.nn.one_hot(nbr_tags, feat_dim,
                                    dtype=jnp.float32).sum(axis=2)          # [B, N, feat_dim]

    params = make_params(k_params, feat_dim, embedding_size,
                         hidden_size, mlp_hidden, num_class)

    log_probs = lstm_classifier_forward(node_feat, neighbor1_feat, params, num_class)
    log_probs = jax.block_until_ready(log_probs)

    assert log_probs.shape == (batch_graphs, num_class)
    assert bool(jnp.isfinite(log_probs).all())
    assert bool(jnp.allclose(jnp.exp(log_probs).sum(axis=1), 1.0, atol=1e-4))

    # Tolerance check vs. the pure-JAX f32 reference.
    ref = reference_forward(node_feat, neighbor1_feat, params)
    ref = jax.block_until_ready(ref)
    assert bool(jnp.allclose(log_probs, ref, atol=5e-2, rtol=5e-2))

    # Glue: NLL loss / prediction vs. labels, as MLPClassifier would compute.
    labels = jax.random.randint(jax.random.PRNGKey(1), (batch_graphs,), 0, num_class)
    loss = -jnp.take_along_axis(log_probs, labels[:, None], axis=1).mean()
    pred = jnp.argmax(log_probs, axis=1)
    jax.block_until_ready((loss, pred))

    print("KERNEL_OK")
</pallas_src>

<mosaic_0001>
module attributes {stable_mosaic.version = 11 : i64} {
  func.func @lstm_classifier_kernel(%arg0: i32, %arg1: memref<128x32xf32, #tpu.memory_space<vmem>>, %arg2: memref<32x128xf32, #tpu.memory_space<vmem>>, %arg3: memref<1x128xf32, #tpu.memory_space<vmem>>, %arg4: memref<32x128xf32, #tpu.memory_space<vmem>>, %arg5: memref<32x16xf32, #tpu.memory_space<vmem>>, %arg6: memref<1x16xf32, #tpu.memory_space<vmem>>, %arg7: memref<16x4xf32, #tpu.memory_space<vmem>>, %arg8: memref<1x4xf32, #tpu.memory_space<vmem>>, %arg9: memref<16x4xf32, #tpu.memory_space<vmem>>) attributes {dimension_semantics = [#tpu.dimension_semantics<parallel>], iteration_bounds = array<i64: 1>, scalar_prefetch = 0 : i64, scratch_operands = 0 : i64, tpu.core_type = #tpu.core_type<tc>, window_params = [{transform_indices = @transform_0, window_bounds = array<i64: 128, 32>}, {pipeline_mode = #tpu.pipeline_mode<synchronous>, transform_indices = @transform_1, window_bounds = array<i64: 32, 128>}, {pipeline_mode = #tpu.pipeline_mode<synchronous>, transform_indices = @transform_2, window_bounds = array<i64: 1, 128>}, {pipeline_mode = #tpu.pipeline_mode<synchronous>, transform_indices = @transform_3, window_bounds = array<i64: 32, 128>}, {pipeline_mode = #tpu.pipeline_mode<synchronous>, transform_indices = @transform_4, window_bounds = array<i64: 32, 16>}, {pipeline_mode = #tpu.pipeline_mode<synchronous>, transform_indices = @transform_5, window_bounds = array<i64: 1, 16>}, {pipeline_mode = #tpu.pipeline_mode<synchronous>, transform_indices = @transform_6, window_bounds = array<i64: 16, 4>}, {pipeline_mode = #tpu.pipeline_mode<synchronous>, transform_indices = @transform_7, window_bounds = array<i64: 1, 4>}, {transform_indices = @transform_8, window_bounds = array<i64: 16, 4>}]} {
    %c0 = arith.constant 0 : index
    %c0_0 = arith.constant 0 : index
    %0 = vector.load %arg1[%c0, %c0_0] : memref<128x32xf32, #tpu.memory_space<vmem>>, vector<128x32xf32>
    %c0_1 = arith.constant 0 : index
    %c0_2 = arith.constant 0 : index
    %1 = vector.load %arg4[%c0_1, %c0_2] : memref<32x128xf32, #tpu.memory_space<vmem>>, vector<32x128xf32>
    %c0_3 = arith.constant 0 : index
    %c0_4 = arith.constant 0 : index
    %2 = vector.load %arg2[%c0_3, %c0_4] : memref<32x128xf32, #tpu.memory_space<vmem>>, vector<32x128xf32>
    %cst = arith.constant dense<0.000000e+00> : vector<128x128xf32>
    %3 = tpu.matmul %0, %2, %cst {dimension_numbers = #tpu.dot_dimension_numbers<[1], [0], [0], [1], [0, 0, 1, 1], [], []>} : vector<128x32xf32>, vector<32x128xf32>, vector<128x128xf32> -> vector<128x128xf32>
    %c0_5 = arith.constant 0 : index
    %c0_6 = arith.constant 0 : index
    %4 = vector.load %arg3[%c0_5, %c0_6] : memref<1x128xf32, #tpu.memory_space<vmem>>, vector<1x128xf32>
    %5 = vector.broadcast %4 : vector<1x128xf32> to vector<128x128xf32>
    %6 = arith.addf %3, %5 : vector<128x128xf32>
    %cst_7 = arith.constant 0.000000e+00 : f32
    %7 = vector.broadcast %cst_7 : f32 to vector<8x32xf32>
    %cst_8 = arith.constant 0.000000e+00 : f32
    %8 = vector.broadcast %cst_8 : f32 to vector<8x32xf32>
    %cst_9 = arith.constant 0.000000e+00 : f32
    %9 = vector.broadcast %cst_9 : f32 to vector<8x32xf32>
    %cst_10 = arith.constant 0.000000e+00 : f32
    %10 = vector.broadcast %cst_10 : f32 to vector<8x32xf32>
    %cst_11 = arith.constant 0.000000e+00 : f32
    %11 = vector.broadcast %cst_11 : f32 to vector<8x32xf32>
    %cst_12 = arith.constant 0.000000e+00 : f32
    %12 = vector.broadcast %cst_12 : f32 to vector<8x32xf32>
    %13 = vector.extract_strided_slice %6 {offsets = [0, 0], sizes = [8, 128], strides = [1, 1]} : vector<128x128xf32> to vector<8x128xf32>
    %cst_13 = arith.constant dense<0.000000e+00> : vector<8x128xf32>
    %14 = tpu.matmul %7, %1, %cst_13 {dimension_numbers = #tpu.dot_dimension_numbers<[1], [0], [0], [1], [0, 0, 1, 1], [], []>} : vector<8x32xf32>, vector<32x128xf32>, vector<8x128xf32> -> vector<8x128xf32>
    %15 = arith.addf %13, %14 : vector<8x128xf32>
    %16 = arith.negf %15 : vector<8x128xf32>
    %17 = math.exp %16 : vector<8x128xf32>
    %cst_14 = arith.constant 1.000000e+00 : f32
    %18 = vector.broadcast %cst_14 : f32 to vector<8x128xf32>
    %19 = arith.addf %18, %17 : vector<8x128xf32>
    %20 = arith.divf %18, %19 : vector<8x128xf32>
    %21 = vector.extract_strided_slice %15 {offsets = [0, 64], sizes = [8, 32], strides = [1, 1]} : vector<8x128xf32> to vector<8x32xf32>
    %22 = math.tanh %21 : vector<8x32xf32>
    %23 = vector.extract_strided_slice %20 {offsets = [0, 0], sizes = [8, 32], strides = [1, 1]} : vector<8x128xf32> to vector<8x32xf32>
    %24 = vector.extract_strided_slice %20 {offsets = [0, 32], sizes = [8, 32], strides = [1, 1]} : vector<8x128xf32> to vector<8x32xf32>
    %25 = vector.extract_strided_slice %20 {offsets = [0, 96], sizes = [8, 32], strides = [1, 1]} : vector<8x128xf32> to vector<8x32xf32>
    %26 = arith.mulf %24, %9 : vector<8x32xf32>
    %27 = arith.mulf %23, %22 : vector<8x32xf32>
    %28 = arith.addf %26, %27 : vector<8x32xf32>
    %29 = math.tanh %28 : vector<8x32xf32>
    %30 = arith.mulf %25, %29 : vector<8x32xf32>
    %31 = arith.addf %11, %30 : vector<8x32xf32>
    %32 = vector.extract_strided_slice %6 {offsets = [8, 0], sizes = [8, 128], strides = [1, 1]} : vector<128x128xf32> to vector<8x128xf32>
    %cst_15 = arith.constant dense<0.000000e+00> : vector<8x128xf32>
    %33 = tpu.matmul %8, %1, %cst_15 {dimension_numbers = #tpu.dot_dimension_numbers<[1], [0], [0], [1], [0, 0, 1, 1], [], []>} : vector<8x32xf32>, vector<32x128xf32>, vector<8x128xf32> -> vector<8x128xf32>
    %34 = arith.addf %32, %33 : vector<8x128xf32>
    %35 = arith.negf %34 : vector<8x128xf32>
    %36 = math.exp %35 : vector<8x128xf32>
    %cst_16 = arith.constant 1.000000e+00 : f32
    %37 = vector.broadcast %cst_16 : f32 to vector<8x128xf32>
    %38 = arith.addf %37, %36 : vector<8x128xf32>
    %39 = arith.divf %37, %38 : vector<8x128xf32>
    %40 = vector.extract_strided_slice %34 {offsets = [0, 64], sizes = [8, 32], strides = [1, 1]} : vector<8x128xf32> to vector<8x32xf32>
    %41 = math.tanh %40 : vector<8x32xf32>
    %42 = vector.extract_strided_slice %39 {offsets = [0, 0], sizes = [8, 32], strides = [1, 1]} : vector<8x128xf32> to vector<8x32xf32>
    %43 = vector.extract_strided_slice %39 {offsets = [0, 32], sizes = [8, 32], strides = [1, 1]} : vector<8x128xf32> to vector<8x32xf32>
    %44 = vector.extract_strided_slice %39 {offsets = [0, 96], sizes = [8, 32], strides = [1, 1]} : vector<8x128xf32> to vector<8x32xf32>
    %45 = arith.mulf %43, %10 : vector<8x32xf32>
    %46 = arith.mulf %42, %41 : vector<8x32xf32>
    %47 = arith.addf %45, %46 : vector<8x32xf32>
    %48 = math.tanh %47 : vector<8x32xf32>
    %49 = arith.mulf %44, %48 : vector<8x32xf32>
    %50 = arith.addf %12, %49 : vector<8x32xf32>
    %51 = vector.extract_strided_slice %6 {offsets = [16, 0], sizes = [8, 128], strides = [1, 1]} : vector<128x128xf32> to vector<8x128xf32>
    %cst_17 = arith.constant dense<0.000000e+00> : vector<8x128xf32>
    %52 = tpu.matmul %30, %1, %cst_17 {dimension_numbers = #tpu.dot_dimension_numbers<[1], [0], [0], [1], [0, 0, 1, 1], [], []>} : vector<8x32xf32>, vector<32x128xf32>, vector<8x128xf32> -> vector<8x128xf32>
    %53 = arith.addf %51, %52 : vector<8x128xf32>
    %54 = arith.negf %53 : vector<8x128xf32>
    %55 = math.exp %54 : vector<8x128xf32>
    %cst_18 = arith.constant 1.000000e+00 : f32
    %56 = vector.broadcast %cst_18 : f32 to vector<8x128xf32>
    %57 = arith.addf %56, %55 : vector<8x128xf32>
    %58 = arith.divf %56, %57 : vector<8x128xf32>
    %59 = vector.extract_strided_slice %53 {offsets = [0, 64], sizes = [8, 32], strides = [1, 1]} : vector<8x128xf32> to vector<8x32xf32>
    %60 = math.tanh %59 : vector<8x32xf32>
    %61 = vector.extract_strided_slice %58 {offsets = [0, 0], sizes = [8, 32], strides = [1, 1]} : vector<8x128xf32> to vector<8x32xf32>
    %62 = vector.extract_strided_slice %58 {offsets = [0, 32], sizes = [8, 32], strides = [1, 1]} : vector<8x128xf32> to vector<8x32xf32>
    %63 = vector.extract_strided_slice %58 {offsets = [0, 96], sizes = [8, 32], strides = [1, 1]} : vector<8x128xf32> to vector<8x32xf32>
    %64 = arith.mulf %62, %28 : vector<8x32xf32>
    %65 = arith.mulf %61, %60 : vector<8x32xf32>
    %66 = arith.addf %64, %65 : vector<8x32xf32>
    %67 = math.tanh %66 : vector<8x32xf32>
    %68 = arith.mulf %63, %67 : vector<8x32xf32>
    %69 = arith.addf %31, %68 : vector<8x32xf32>
    %70 = vector.extract_strided_slice %6 {offsets = [24, 0], sizes = [8, 128], strides = [1, 1]} : vector<128x128xf32> to vector<8x128xf32>
    %cst_19 = arith.constant dense<0.000000e+00> : vector<8x128xf32>
    %71 = tpu.matmul %49, %1, %cst_19 {dimension_numbers = #tpu.dot_dimension_numbers<[1], [0], [0], [1], [0, 0, 1, 1], [], []>} : vector<8x32xf32>, vector<32x128xf32>, vector<8x128xf32> -> vector<8x128xf32>
    %72 = arith.addf %70, %71 : vector<8x128xf32>
    %73 = arith.negf %72 : vector<8x128xf32>
    %74 = math.exp %73 : vector<8x128xf32>
    %cst_20 = arith.constant 1.000000e+00 : f32
    %75 = vector.broadcast %cst_20 : f32 to vector<8x128xf32>
    %76 = arith.addf %75, %74 : vector<8x128xf32>
    %77 = arith.divf %75, %76 : vector<8x128xf32>
    %78 = vector.extract_strided_slice %72 {offsets = [0, 64], sizes = [8, 32], strides = [1, 1]} : vector<8x128xf32> to vector<8x32xf32>
    %79 = math.tanh %78 : vector<8x32xf32>
    %80 = vector.extract_strided_slice %77 {offsets = [0, 0], sizes = [8, 32], strides = [1, 1]} : vector<8x128xf32> to vector<8x32xf32>
    %81 = vector.extract_strided_slice %77 {offsets = [0, 32], sizes = [8, 32], strides = [1, 1]} : vector<8x128xf32> to vector<8x32xf32>
    %82 = vector.extract_strided_slice %77 {offsets = [0, 96], sizes = [8, 32], strides = [1, 1]} : vector<8x128xf32> to vector<8x32xf32>
    %83 = arith.mulf %81, %47 : vector<8x32xf32>
    %84 = arith.mulf %80, %79 : vector<8x32xf32>
    %85 = arith.addf %83, %84 : vector<8x32xf32>
    %86 = math.tanh %85 : vector<8x32xf32>
    %87 = arith.mulf %82, %86 : vector<8x32xf32>
    %88 = arith.addf %50, %87 : vector<8x32xf32>
    %89 = vector.extract_strided_slice %6 {offsets = [32, 0], sizes = [8, 128], strides = [1, 1]} : vector<128x128xf32> to vector<8x128xf32>
    %cst_21 = arith.constant dense<0.000000e+00> : vector<8x128xf32>
    %90 = tpu.matmul %68, %1, %cst_21 {dimension_numbers = #tpu.dot_dimension_numbers<[1], [0], [0], [1], [0, 0, 1, 1], [], []>} : vector<8x32xf32>, vector<32x128xf32>, vector<8x128xf32> -> vector<8x128xf32>
    %91 = arith.addf %89, %90 : vector<8x128xf32>
    %92 = arith.negf %91 : vector<8x128xf32>
    %93 = math.exp %92 : vector<8x128xf32>
    %cst_22 = arith.constant 1.000000e+00 : f32
    %94 = vector.broadcast %cst_22 : f32 to vector<8x128xf32>
    %95 = arith.addf %94, %93 : vector<8x128xf32>
    %96 = arith.divf %94, %95 : vector<8x128xf32>
    %97 = vector.extract_strided_slice %91 {offsets = [0, 64], sizes = [8, 32], strides = [1, 1]} : vector<8x128xf32> to vector<8x32xf32>
    %98 = math.tanh %97 : vector<8x32xf32>
    %99 = vector.extract_strided_slice %96 {offsets = [0, 0], sizes = [8, 32], strides = [1, 1]} : vector<8x128xf32> to vector<8x32xf32>
    %100 = vector.extract_strided_slice %96 {offsets = [0, 32], sizes = [8, 32], strides = [1, 1]} : vector<8x128xf32> to vector<8x32xf32>
    %101 = vector.extract_strided_slice %96 {offsets = [0, 96], sizes = [8, 32], strides = [1, 1]} : vector<8x128xf32> to vector<8x32xf32>
    %102 = arith.mulf %100, %66 : vector<8x32xf32>
    %103 = arith.mulf %99, %98 : vector<8x32xf32>
    %104 = arith.addf %102, %103 : vector<8x32xf32>
    %105 = math.tanh %104 : vector<8x32xf32>
    %106 = arith.mulf %101, %105 : vector<8x32xf32>
    %107 = arith.addf %69, %106 : vector<8x32xf32>
    %108 = vector.extract_strided_slice %6 {offsets = [40, 0], sizes = [8, 128], strides = [1, 1]} : vector<128x128xf32> to vector<8x128xf32>
    %cst_23 = arith.constant dense<0.000000e+00> : vector<8x128xf32>
    %109 = tpu.matmul %87, %1, %cst_23 {dimension_numbers = #tpu.dot_dimension_numbers<[1], [0], [0], [1], [0, 0, 1, 1], [], []>} : vector<8x32xf32>, vector<32x128xf32>, vector<8x128xf32> -> vector<8x128xf32>
    %110 = arith.addf %108, %109 : vector<8x128xf32>
    %111 = arith.negf %110 : vector<8x128xf32>
    %112 = math.exp %111 : vector<8x128xf32>
    %cst_24 = arith.constant 1.000000e+00 : f32
    %113 = vector.broadcast %cst_24 : f32 to vector<8x128xf32>
    %114 = arith.addf %113, %112 : vector<8x128xf32>
    %115 = arith.divf %113, %114 : vector<8x128xf32>
    %116 = vector.extract_strided_slice %110 {offsets = [0, 64], sizes = [8, 32], strides = [1, 1]} : vector<8x128xf32> to vector<8x32xf32>
    %117 = math.tanh %116 : vector<8x32xf32>
    %118 = vector.extract_strided_slice %115 {offsets = [0, 0], sizes = [8, 32], strides = [1, 1]} : vector<8x128xf32> to vector<8x32xf32>
    %119 = vector.extract_strided_slice %115 {offsets = [0, 32], sizes = [8, 32], strides = [1, 1]} : vector<8x128xf32> to vector<8x32xf32>
    %120 = vector.extract_strided_slice %115 {offsets = [0, 96], sizes = [8, 32], strides = [1, 1]} : vector<8x128xf32> to vector<8x32xf32>
    %121 = arith.mulf %119, %85 : vector<8x32xf32>
    %122 = arith.mulf %118, %117 : vector<8x32xf32>
    %123 = arith.addf %121, %122 : vector<8x32xf32>
    %124 = math.tanh %123 : vector<8x32xf32>
    %125 = arith.mulf %120, %124 : vector<8x32xf32>
    %126 = arith.addf %88, %125 : vector<8x32xf32>
    %127 = vector.extract_strided_slice %6 {offsets = [48, 0], sizes = [8, 128], strides = [1, 1]} : vector<128x128xf32> to vector<8x128xf32>
    %cst_25 = arith.constant dense<0.000000e+00> : vector<8x128xf32>
    %128 = tpu.matmul %106, %1, %cst_25 {dimension_numbers = #tpu.dot_dimension_numbers<[1], [0], [0], [1], [0, 0, 1, 1], [], []>} : vector<8x32xf32>, vector<32x128xf32>, vector<8x128xf32> -> vector<8x128xf32>
    %129 = arith.addf %127, %128 : vector<8x128xf32>
    %130 = arith.negf %129 : vector<8x128xf32>
    %131 = math.exp %130 : vector<8x128xf32>
    %cst_26 = arith.constant 1.000000e+00 : f32
    %132 = vector.broadcast %cst_26 : f32 to vector<8x128xf32>
    %133 = arith.addf %132, %131 : vector<8x128xf32>
    %134 = arith.divf %132, %133 : vector<8x128xf32>
    %135 = vector.extract_strided_slice %129 {offsets = [0, 64], sizes = [8, 32], strides = [1, 1]} : vector<8x128xf32> to vector<8x32xf32>
    %136 = math.tanh %135 : vector<8x32xf32>
    %137 = vector.extract_strided_slice %134 {offsets = [0, 0], sizes = [8, 32], strides = [1, 1]} : vector<8x128xf32> to vector<8x32xf32>
    %138 = vector.extract_strided_slice %134 {offsets = [0, 32], sizes = [8, 32], strides = [1, 1]} : vector<8x128xf32> to vector<8x32xf32>
    %139 = vector.extract_strided_slice %134 {offsets = [0, 96], sizes = [8, 32], strides = [1, 1]} : vector<8x128xf32> to vector<8x32xf32>
    %140 = arith.mulf %138, %104 : vector<8x32xf32>
    %141 = arith.mulf %137, %136 : vector<8x32xf32>
    %142 = arith.addf %140, %141 : vector<8x32xf32>
    %143 = math.tanh %142 : vector<8x32xf32>
    %144 = arith.mulf %139, %143 : vector<8x32xf32>
    %145 = arith.addf %107, %144 : vector<8x32xf32>
    %146 = vector.extract_strided_slice %6 {offsets = [56, 0], sizes = [8, 128], strides = [1, 1]} : vector<128x128xf32> to vector<8x128xf32>
    %cst_27 = arith.constant dense<0.000000e+00> : vector<8x128xf32>
    %147 = tpu.matmul %125, %1, %cst_27 {dimension_numbers = #tpu.dot_dimension_numbers<[1], [0], [0], [1], [0, 0, 1, 1], [], []>} : vector<8x32xf32>, vector<32x128xf32>, vector<8x128xf32> -> vector<8x128xf32>
    %148 = arith.addf %146, %147 : vector<8x128xf32>
    %149 = arith.negf %148 : vector<8x128xf32>
    %150 = math.exp %149 : vector<8x128xf32>
    %cst_28 = arith.constant 1.000000e+00 : f32
    %151 = vector.broadcast %cst_28 : f32 to vector<8x128xf32>
    %152 = arith.addf %151, %150 : vector<8x128xf32>
    %153 = arith.divf %151, %152 : vector<8x128xf32>
    %154 = vector.extract_strided_slice %148 {offsets = [0, 64], sizes = [8, 32], strides = [1, 1]} : vector<8x128xf32> to vector<8x32xf32>
    %155 = math.tanh %154 : vector<8x32xf32>
    %156 = vector.extract_strided_slice %153 {offsets = [0, 0], sizes = [8, 32], strides = [1, 1]} : vector<8x128xf32> to vector<8x32xf32>
    %157 = vector.extract_strided_slice %153 {offsets = [0, 32], sizes = [8, 32], strides = [1, 1]} : vector<8x128xf32> to vector<8x32xf32>
    %158 = vector.extract_strided_slice %153 {offsets = [0, 96], sizes = [8, 32], strides = [1, 1]} : vector<8x128xf32> to vector<8x32xf32>
    %159 = arith.mulf %157, %123 : vector<8x32xf32>
    %160 = arith.mulf %156, %155 : vector<8x32xf32>
    %161 = arith.addf %159, %160 : vector<8x32xf32>
    %162 = math.tanh %161 : vector<8x32xf32>
    %163 = arith.mulf %158, %162 : vector<8x32xf32>
    %164 = arith.addf %126, %163 : vector<8x32xf32>
    %165 = vector.extract_strided_slice %6 {offsets = [64, 0], sizes = [8, 128], strides = [1, 1]} : vector<128x128xf32> to vector<8x128xf32>
    %cst_29 = arith.constant dense<0.000000e+00> : vector<8x128xf32>
    %166 = tpu.matmul %144, %1, %cst_29 {dimension_numbers = #tpu.dot_dimension_numbers<[1], [0], [0], [1], [0, 0, 1, 1], [], []>} : vector<8x32xf32>, vector<32x128xf32>, vector<8x128xf32> -> vector<8x128xf32>
    %167 = arith.addf %165, %166 : vector<8x128xf32>
    %168 = arith.negf %167 : vector<8x128xf32>
    %169 = math.exp %168 : vector<8x128xf32>
    %cst_30 = arith.constant 1.000000e+00 : f32
    %170 = vector.broadcast %cst_30 : f32 to vector<8x128xf32>
    %171 = arith.addf %170, %169 : vector<8x128xf32>
    %172 = arith.divf %170, %171 : vector<8x128xf32>
    %173 = vector.extract_strided_slice %167 {offsets = [0, 64], sizes = [8, 32], strides = [1, 1]} : vector<8x128xf32> to vector<8x32xf32>
    %174 = math.tanh %173 : vector<8x32xf32>
    %175 = vector.extract_strided_slice %172 {offsets = [0, 0], sizes = [8, 32], strides = [1, 1]} : vector<8x128xf32> to vector<8x32xf32>
    %176 = vector.extract_strided_slice %172 {offsets = [0, 32], sizes = [8, 32], strides = [1, 1]} : vector<8x128xf32> to vector<8x32xf32>
    %177 = vector.extract_strided_slice %172 {offsets = [0, 96], sizes = [8, 32], strides = [1, 1]} : vector<8x128xf32> to vector<8x32xf32>
    %178 = arith.mulf %176, %142 : vector<8x32xf32>
    %179 = arith.mulf %175, %174 : vector<8x32xf32>
    %180 = arith.addf %178, %179 : vector<8x32xf32>
    %181 = math.tanh %180 : vector<8x32xf32>
    %182 = arith.mulf %177, %181 : vector<8x32xf32>
    %183 = arith.addf %145, %182 : vector<8x32xf32>
    %184 = vector.extract_strided_slice %6 {offsets = [72, 0], sizes = [8, 128], strides = [1, 1]} : vector<128x128xf32> to vector<8x128xf32>
    %cst_31 = arith.constant dense<0.000000e+00> : vector<8x128xf32>
    %185 = tpu.matmul %163, %1, %cst_31 {dimension_numbers = #tpu.dot_dimension_numbers<[1], [0], [0], [1], [0, 0, 1, 1], [], []>} : vector<8x32xf32>, vector<32x128xf32>, vector<8x128xf32> -> vector<8x128xf32>
    %186 = arith.addf %184, %185 : vector<8x128xf32>
    %187 = arith.negf %186 : vector<8x128xf32>
    %188 = math.exp %187 : vector<8x128xf32>
    %cst_32 = arith.constant 1.000000e+00 : f32
    %189 = vector.broadcast %cst_32 : f32 to vector<8x128xf32>
    %190 = arith.addf %189, %188 : vector<8x128xf32>
    %191 = arith.divf %189, %190 : vector<8x128xf32>
    %192 = vector.extract_strided_slice %186 {offsets = [0, 64], sizes = [8, 32], strides = [1, 1]} : vector<8x128xf32> to vector<8x32xf32>
    %193 = math.tanh %192 : vector<8x32xf32>
    %194 = vector.extract_strided_slice %191 {offsets = [0, 0], sizes = [8, 32], strides = [1, 1]} : vector<8x128xf32> to vector<8x32xf32>
    %195 = vector.extract_strided_slice %191 {offsets = [0, 32], sizes = [8, 32], strides = [1, 1]} : vector<8x128xf32> to vector<8x32xf32>
    %196 = vector.extract_strided_slice %191 {offsets = [0, 96], sizes = [8, 32], strides = [1, 1]} : vector<8x128xf32> to vector<8x32xf32>
    %197 = arith.mulf %195, %161 : vector<8x32xf32>
    %198 = arith.mulf %194, %193 : vector<8x32xf32>
    %199 = arith.addf %197, %198 : vector<8x32xf32>
    %200 = math.tanh %199 : vector<8x32xf32>
    %201 = arith.mulf %196, %200 : vector<8x32xf32>
    %202 = arith.addf %164, %201 : vector<8x32xf32>
    %203 = vector.extract_strided_slice %6 {offsets = [80, 0], sizes = [8, 128], strides = [1, 1]} : vector<128x128xf32> to vector<8x128xf32>
    %cst_33 = arith.constant dense<0.000000e+00> : vector<8x128xf32>
    %204 = tpu.matmul %182, %1, %cst_33 {dimension_numbers = #tpu.dot_dimension_numbers<[1], [0], [0], [1], [0, 0, 1, 1], [], []>} : vector<8x32xf32>, vector<32x128xf32>, vector<8x128xf32> -> vector<8x128xf32>
    %205 = arith.addf %203, %204 : vector<8x128xf32>
    %206 = arith.negf %205 : vector<8x128xf32>
    %207 = math.exp %206 : vector<8x128xf32>
    %cst_34 = arith.constant 1.000000e+00 : f32
    %208 = vector.broadcast %cst_34 : f32 to vector<8x128xf32>
    %209 = arith.addf %208, %207 : vector<8x128xf32>
    %210 = arith.divf %208, %209 : vector<8x128xf32>
    %211 = vector.extract_strided_slice %205 {offsets = [0, 64], sizes = [8, 32], strides = [1, 1]} : vector<8x128xf32> to vector<8x32xf32>
    %212 = math.tanh %211 : vector<8x32xf32>
    %213 = vector.extract_strided_slice %210 {offsets = [0, 0], sizes = [8, 32], strides = [1, 1]} : vector<8x128xf32> to vector<8x32xf32>
    %214 = vector.extract_strided_slice %210 {offsets = [0, 32], sizes = [8, 32], strides = [1, 1]} : vector<8x128xf32> to vector<8x32xf32>
    %215 = vector.extract_strided_slice %210 {offsets = [0, 96], sizes = [8, 32], strides = [1, 1]} : vector<8x128xf32> to vector<8x32xf32>
    %216 = arith.mulf %214, %180 : vector<8x32xf32>
    %217 = arith.mulf %213, %212 : vector<8x32xf32>
    %218 = arith.addf %216, %217 : vector<8x32xf32>
    %219 = math.tanh %218 : vector<8x32xf32>
    %220 = arith.mulf %215, %219 : vector<8x32xf32>
    %221 = arith.addf %183, %220 : vector<8x32xf32>
    %222 = vector.extract_strided_slice %6 {offsets = [88, 0], sizes = [8, 128], strides = [1, 1]} : vector<128x128xf32> to vector<8x128xf32>
    %cst_35 = arith.constant dense<0.000000e+00> : vector<8x128xf32>
    %223 = tpu.matmul %201, %1, %cst_35 {dimension_numbers = #tpu.dot_dimension_numbers<[1], [0], [0], [1], [0, 0, 1, 1], [], []>} : vector<8x32xf32>, vector<32x128xf32>, vector<8x128xf32> -> vector<8x128xf32>
    %224 = arith.addf %222, %223 : vector<8x128xf32>
    %225 = arith.negf %224 : vector<8x128xf32>
    %226 = math.exp %225 : vector<8x128xf32>
    %cst_36 = arith.constant 1.000000e+00 : f32
    %227 = vector.broadcast %cst_36 : f32 to vector<8x128xf32>
    %228 = arith.addf %227, %226 : vector<8x128xf32>
    %229 = arith.divf %227, %228 : vector<8x128xf32>
    %230 = vector.extract_strided_slice %224 {offsets = [0, 64], sizes = [8, 32], strides = [1, 1]} : vector<8x128xf32> to vector<8x32xf32>
    %231 = math.tanh %230 : vector<8x32xf32>
    %232 = vector.extract_strided_slice %229 {offsets = [0, 0], sizes = [8, 32], strides = [1, 1]} : vector<8x128xf32> to vector<8x32xf32>
    %233 = vector.extract_strided_slice %229 {offsets = [0, 32], sizes = [8, 32], strides = [1, 1]} : vector<8x128xf32> to vector<8x32xf32>
    %234 = vector.extract_strided_slice %229 {offsets = [0, 96], sizes = [8, 32], strides = [1, 1]} : vector<8x128xf32> to vector<8x32xf32>
    %235 = arith.mulf %233, %199 : vector<8x32xf32>
    %236 = arith.mulf %232, %231 : vector<8x32xf32>
    %237 = arith.addf %235, %236 : vector<8x32xf32>
    %238 = math.tanh %237 : vector<8x32xf32>
    %239 = arith.mulf %234, %238 : vector<8x32xf32>
    %240 = arith.addf %202, %239 : vector<8x32xf32>
    %241 = vector.extract_strided_slice %6 {offsets = [96, 0], sizes = [8, 128], strides = [1, 1]} : vector<128x128xf32> to vector<8x128xf32>
    %cst_37 = arith.constant dense<0.000000e+00> : vector<8x128xf32>
    %242 = tpu.matmul %220, %1, %cst_37 {dimension_numbers = #tpu.dot_dimension_numbers<[1], [0], [0], [1], [0, 0, 1, 1], [], []>} : vector<8x32xf32>, vector<32x128xf32>, vector<8x128xf32> -> vector<8x128xf32>
    %243 = arith.addf %241, %242 : vector<8x128xf32>
    %244 = arith.negf %243 : vector<8x128xf32>
    %245 = math.exp %244 : vector<8x128xf32>
    %cst_38 = arith.constant 1.000000e+00 : f32
    %246 = vector.broadcast %cst_38 : f32 to vector<8x128xf32>
    %247 = arith.addf %246, %245 : vector<8x128xf32>
    %248 = arith.divf %246, %247 : vector<8x128xf32>
    %249 = vector.extract_strided_slice %243 {offsets = [0, 64], sizes = [8, 32], strides = [1, 1]} : vector<8x128xf32> to vector<8x32xf32>
    %250 = math.tanh %249 : vector<8x32xf32>
    %251 = vector.extract_strided_slice %248 {offsets = [0, 0], sizes = [8, 32], strides = [1, 1]} : vector<8x128xf32> to vector<8x32xf32>
    %252 = vector.extract_strided_slice %248 {offsets = [0, 32], sizes = [8, 32], strides = [1, 1]} : vector<8x128xf32> to vector<8x32xf32>
    %253 = vector.extract_strided_slice %248 {offsets = [0, 96], sizes = [8, 32], strides = [1, 1]} : vector<8x128xf32> to vector<8x32xf32>
    %254 = arith.mulf %252, %218 : vector<8x32xf32>
    %255 = arith.mulf %251, %250 : vector<8x32xf32>
    %256 = arith.addf %254, %255 : vector<8x32xf32>
    %257 = math.tanh %256 : vector<8x32xf32>
    %258 = arith.mulf %253, %257 : vector<8x32xf32>
    %259 = arith.addf %221, %258 : vector<8x32xf32>
    %260 = vector.extract_strided_slice %6 {offsets = [104, 0], sizes = [8, 128], strides = [1, 1]} : vector<128x128xf32> to vector<8x128xf32>
    %cst_39 = arith.constant dense<0.000000e+00> : vector<8x128xf32>
    %261 = tpu.matmul %239, %1, %cst_39 {dimension_numbers = #tpu.dot_dimension_numbers<[1], [0], [0], [1], [0, 0, 1, 1], [], []>} : vector<8x32xf32>, vector<32x128xf32>, vector<8x128xf32> -> vector<8x128xf32>
    %262 = arith.addf %260, %261 : vector<8x128xf32>
    %263 = arith.negf %262 : vector<8x128xf32>
    %264 = math.exp %263 : vector<8x128xf32>
    %cst_40 = arith.constant 1.000000e+00 : f32
    %265 = vector.broadcast %cst_40 : f32 to vector<8x128xf32>
    %266 = arith.addf %265, %264 : vector<8x128xf32>
    %267 = arith.divf %265, %266 : vector<8x128xf32>
    %268 = vector.extract_strided_slice %262 {offsets = [0, 64], sizes = [8, 32], strides = [1, 1]} : vector<8x128xf32> to vector<8x32xf32>
    %269 = math.tanh %268 : vector<8x32xf32>
    %270 = vector.extract_strided_slice %267 {offsets = [0, 0], sizes = [8, 32], strides = [1, 1]} : vector<8x128xf32> to vector<8x32xf32>
    %271 = vector.extract_strided_slice %267 {offsets = [0, 32], sizes = [8, 32], strides = [1, 1]} : vector<8x128xf32> to vector<8x32xf32>
    %272 = vector.extract_strided_slice %267 {offsets = [0, 96], sizes = [8, 32], strides = [1, 1]} : vector<8x128xf32> to vector<8x32xf32>
    %273 = arith.mulf %271, %237 : vector<8x32xf32>
    %274 = arith.mulf %270, %269 : vector<8x32xf32>
    %275 = arith.addf %273, %274 : vector<8x32xf32>
    %276 = math.tanh %275 : vector<8x32xf32>
    %277 = arith.mulf %272, %276 : vector<8x32xf32>
    %278 = arith.addf %240, %277 : vector<8x32xf32>
    %279 = vector.extract_strided_slice %6 {offsets = [112, 0], sizes = [8, 128], strides = [1, 1]} : vector<128x128xf32> to vector<8x128xf32>
    %cst_41 = arith.constant dense<0.000000e+00> : vector<8x128xf32>
    %280 = tpu.matmul %258, %1, %cst_41 {dimension_numbers = #tpu.dot_dimension_numbers<[1], [0], [0], [1], [0, 0, 1, 1], [], []>} : vector<8x32xf32>, vector<32x128xf32>, vector<8x128xf32> -> vector<8x128xf32>
    %281 = arith.addf %279, %280 : vector<8x128xf32>
    %282 = arith.negf %281 : vector<8x128xf32>
    %283 = math.exp %282 : vector<8x128xf32>
    %cst_42 = arith.constant 1.000000e+00 : f32
    %284 = vector.broadcast %cst_42 : f32 to vector<8x128xf32>
    %285 = arith.addf %284, %283 : vector<8x128xf32>
    %286 = arith.divf %284, %285 : vector<8x128xf32>
    %287 = vector.extract_strided_slice %281 {offsets = [0, 64], sizes = [8, 32], strides = [1, 1]} : vector<8x128xf32> to vector<8x32xf32>
    %288 = math.tanh %287 : vector<8x32xf32>
    %289 = vector.extract_strided_slice %286 {offsets = [0, 0], sizes = [8, 32], strides = [1, 1]} : vector<8x128xf32> to vector<8x32xf32>
    %290 = vector.extract_strided_slice %286 {offsets = [0, 32], sizes = [8, 32], strides = [1, 1]} : vector<8x128xf32> to vector<8x32xf32>
    %291 = vector.extract_strided_slice %286 {offsets = [0, 96], sizes = [8, 32], strides = [1, 1]} : vector<8x128xf32> to vector<8x32xf32>
    %292 = arith.mulf %290, %256 : vector<8x32xf32>
    %293 = arith.mulf %289, %288 : vector<8x32xf32>
    %294 = arith.addf %292, %293 : vector<8x32xf32>
    %295 = math.tanh %294 : vector<8x32xf32>
    %296 = arith.mulf %291, %295 : vector<8x32xf32>
    %297 = arith.addf %259, %296 : vector<8x32xf32>
    %298 = vector.extract_strided_slice %6 {offsets = [120, 0], sizes = [8, 128], strides = [1, 1]} : vector<128x128xf32> to vector<8x128xf32>
    %cst_43 = arith.constant dense<0.000000e+00> : vector<8x128xf32>
    %299 = tpu.matmul %277, %1, %cst_43 {dimension_numbers = #tpu.dot_dimension_numbers<[1], [0], [0], [1], [0, 0, 1, 1], [], []>} : vector<8x32xf32>, vector<32x128xf32>, vector<8x128xf32> -> vector<8x128xf32>
    %300 = arith.addf %298, %299 : vector<8x128xf32>
    %301 = arith.negf %300 : vector<8x128xf32>
    %302 = math.exp %301 : vector<8x128xf32>
    %cst_44 = arith.constant 1.000000e+00 : f32
    %303 = vector.broadcast %cst_44 : f32 to vector<8x128xf32>
    %304 = arith.addf %303, %302 : vector<8x128xf32>
    %305 = arith.divf %303, %304 : vector<8x128xf32>
    %306 = vector.extract_strided_slice %300 {offsets = [0, 64], sizes = [8, 32], strides = [1, 1]} : vector<8x128xf32> to vector<8x32xf32>
    %307 = math.tanh %306 : vector<8x32xf32>
    %308 = vector.extract_strided_slice %305 {offsets = [0, 0], sizes = [8, 32], strides = [1, 1]} : vector<8x128xf32> to vector<8x32xf32>
    %309 = vector.extract_strided_slice %305 {offsets = [0, 32], sizes = [8, 32], strides = [1, 1]} : vector<8x128xf32> to vector<8x32xf32>
    %310 = vector.extract_strided_slice %305 {offsets = [0, 96], sizes = [8, 32], strides = [1, 1]} : vector<8x128xf32> to vector<8x32xf32>
    %311 = arith.mulf %309, %275 : vector<8x32xf32>
    %312 = arith.mulf %308, %307 : vector<8x32xf32>
    %313 = arith.addf %311, %312 : vector<8x32xf32>
    %314 = math.tanh %313 : vector<8x32xf32>
    %315 = arith.mulf %310, %314 : vector<8x32xf32>
    %316 = arith.addf %278, %315 : vector<8x32xf32>
    %317 = tpu.concatenate %297, %316 in 0 : vector<8x32xf32>, vector<8x32xf32> -> vector<16x32xf32>
    %c0_45 = arith.constant 0 : index
    %c0_46 = arith.constant 0 : index
    %318 = vector.load %arg5[%c0_45, %c0_46] : memref<32x16xf32, #tpu.memory_space<vmem>>, vector<32x16xf32>
    %cst_47 = arith.constant dense<0.000000e+00> : vector<16x16xf32>
    %319 = tpu.matmul %317, %318, %cst_47 {dimension_numbers = #tpu.dot_dimension_numbers<[1], [0], [0], [1], [0, 0, 1, 1], [], []>} : vector<16x32xf32>, vector<32x16xf32>, vector<16x16xf32> -> vector<16x16xf32>
    %c0_48 = arith.constant 0 : index
    %c0_49 = arith.constant 0 : index
    %320 = vector.load %arg6[%c0_48, %c0_49] : memref<1x16xf32, #tpu.memory_space<vmem>>, vector<1x16xf32>
    %321 = vector.broadcast %320 : vector<1x16xf32> to vector<16x16xf32>
    %322 = arith.addf %319, %321 : vector<16x16xf32>
    %cst_50 = arith.constant 0.000000e+00 : f32
    %323 = vector.broadcast %cst_50 : f32 to vector<16x16xf32>
    %324 = arith.maximumf %322, %323 : vector<16x16xf32>
    %c0_51 = arith.constant 0 : index
    %c0_52 = arith.constant 0 : index
    %325 = vector.load %arg7[%c0_51, %c0_52] : memref<16x4xf32, #tpu.memory_space<vmem>>, vector<16x4xf32>
    %cst_53 = arith.constant dense<0.000000e+00> : vector<16x4xf32>
    %326 = tpu.matmul %324, %325, %cst_53 {dimension_numbers = #tpu.dot_dimension_numbers<[1], [0], [0], [1], [0, 0, 1, 1], [], []>} : vector<16x16xf32>, vector<16x4xf32>, vector<16x4xf32> -> vector<16x4xf32>
    %c0_54 = arith.constant 0 : index
    %c0_55 = arith.constant 0 : index
    %327 = vector.load %arg8[%c0_54, %c0_55] : memref<1x4xf32, #tpu.memory_space<vmem>>, vector<1x4xf32>
    %328 = vector.broadcast %327 : vector<1x4xf32> to vector<16x4xf32>
    %329 = arith.addf %326, %328 : vector<16x4xf32>
    %cst_56 = arith.constant dense<0xFF800000> : vector<16xf32>
    %330 = vector.multi_reduction <maximumf>, %329, %cst_56 [1] : vector<16x4xf32> to vector<16xf32>
    %331 = vector.shape_cast %330 : vector<16xf32> to vector<16x1xf32>
    %332 = vector.broadcast %331 : vector<16x1xf32> to vector<16x4xf32>
    %333 = arith.subf %329, %332 : vector<16x4xf32>
    %334 = math.exp %333 : vector<16x4xf32>
    %cst_57 = arith.constant dense<0.000000e+00> : vector<16xf32>
    %335 = vector.multi_reduction <add>, %334, %cst_57 [1] : vector<16x4xf32> to vector<16xf32>
    %336 = vector.shape_cast %335 : vector<16xf32> to vector<16x1xf32>
    %337 = math.log %336 : vector<16x1xf32>
    %338 = vector.broadcast %337 : vector<16x1xf32> to vector<16x4xf32>
    %339 = arith.subf %333, %338 : vector<16x4xf32>
    %c0_58 = arith.constant 0 : index
    %c0_59 = arith.constant 0 : index
    %340 = vector.load %arg9[%c0_58, %c0_59] : memref<16x4xf32, #tpu.memory_space<vmem>>, vector<16x4xf32>
    tpu.vector_store %arg9[%c0_58, %c0_59], %339 {strides = array<i32>} : memref<16x4xf32, #tpu.memory_space<vmem>>, vector<16x4xf32>,
    return
  }
  func.func @transform_0(%arg0: i32) -> (i32, i32) {
    %c0_i32 = arith.constant 0 : i32
    %c0_i32_0 = arith.constant 0 : i32
    return %arg0, %c0_i32 : i32, i32
  }
  func.func @transform_1(%arg0: i32) -> (i32, i32) {
    %c0_i32 = arith.constant 0 : i32
    %c0_i32_0 = arith.constant 0 : i32
    %c0_i32_1 = arith.constant 0 : i32
    return %c0_i32, %c0_i32_0 : i32, i32
  }
  func.func @transform_2(%arg0: i32) -> (i32, i32) {
    %c0_i32 = arith.constant 0 : i32
    %c0_i32_0 = arith.constant 0 : i32
    %c0_i32_1 = arith.constant 0 : i32
    return %c0_i32, %c0_i32_0 : i32, i32
  }
  func.func @transform_3(%arg0: i32) -> (i32, i32) {
    %c0_i32 = arith.constant 0 : i32
    %c0_i32_0 = arith.constant 0 : i32
    %c0_i32_1 = arith.constant 0 : i32
    return %c0_i32, %c0_i32_0 : i32, i32
  }
  func.func @transform_4(%arg0: i32) -> (i32, i32) {
    %c0_i32 = arith.constant 0 : i32
    %c0_i32_0 = arith.constant 0 : i32
    %c0_i32_1 = arith.constant 0 : i32
    return %c0_i32, %c0_i32_0 : i32, i32
  }
  func.func @transform_5(%arg0: i32) -> (i32, i32) {
    %c0_i32 = arith.constant 0 : i32
    %c0_i32_0 = arith.constant 0 : i32
    %c0_i32_1 = arith.constant 0 : i32
    return %c0_i32, %c0_i32_0 : i32, i32
  }
  func.func @transform_6(%arg0: i32) -> (i32, i32) {
    %c0_i32 = arith.constant 0 : i32
    %c0_i32_0 = arith.constant 0 : i32
    %c0_i32_1 = arith.constant 0 : i32
    return %c0_i32, %c0_i32_0 : i32, i32
  }
  func.func @transform_7(%arg0: i32) -> (i32, i32) {
    %c0_i32 = arith.constant 0 : i32
    %c0_i32_0 = arith.constant 0 : i32
    %c0_i32_1 = arith.constant 0 : i32
    return %c0_i32, %c0_i32_0 : i32, i32
  }
  func.func @transform_8(%arg0: i32) -> (i32, i32) {
    %c0_i32 = arith.constant 0 : i32
    %c0_i32_0 = arith.constant 0 : i32
    return %arg0, %c0_i32 : i32, i32
  }
}

</mosaic_0001>

<llo_original>
// kernel: _forward_jit.1
$region0: #{_forward_jit.1}
  #allocation0 [shape = 'u32[]', space=smem, size = 0x4, offset = 0x4, fixed_abs, tag = 'smem constant byte address 0x4 - core index']
  #allocation1 [shape = 'u32[144,128]{1,0:T(1,128)}', space=vmem, size = 0x12000, scoped, tag = 'internal scratch']
  %s0 = inlined_call_operand.vmem [shape: f32[128,32], index: 0, kind: input, shape index: {}]
  %s1 = inlined_call_operand.vmem [shape: f32[32,128], index: 1, kind: input, shape index: {}]
  %s2 = inlined_call_operand.vmem [shape: f32[1,128], index: 2, kind: input, shape index: {}]
  %s3 = inlined_call_operand.vmem [shape: f32[32,128], index: 3, kind: input, shape index: {}]
  %s4 = inlined_call_operand.vmem [shape: f32[32,16], index: 4, kind: input, shape index: {}]
  %s5 = inlined_call_operand.vmem [shape: f32[1,16], index: 5, kind: input, shape index: {}]
  %s6 = inlined_call_operand.vmem [shape: f32[16,4], index: 6, kind: input, shape index: {}]
  %s7 = inlined_call_operand.vmem [shape: f32[1,4], index: 7, kind: input, shape index: {}]
  %s8 = inlined_call_operand.vmem [shape: f32[16,4], index: 8, kind: output, shape index: {}]
  %s9 = sld [smem:[#allocation0]]
  $region42: #{_forward_jit.1} parent=0
    _
  %s11 = ssub.s32 1, %s9
  %s12 = scalar_select 0, %s11, %s9
  // Predicated region
  $region2: #{_forward_jit.1} parent=0 // pred_check
    _
  $region3: #{_forward_jit.1} parent=0 // pred_check_branch
    %14 = sbr.rel (0) target = $region5
  $region4: #{_forward_jit.1} parent=0 // pred_region
    _
  $region5: #{_forward_jit.1} parent=0 // pred_fallthru
    _
  // Predicated region
  $region6: #{_forward_jit.1} parent=0 // pred_check
    _
  $region7: #{_forward_jit.1} parent=0 // pred_check_branch
    %16 = sbr.rel (0) target = $region9
  $region8: #{_forward_jit.1} parent=0 // pred_region
    _
  $region9: #{_forward_jit.1} parent=0 // pred_fallthru
    _
  // Predicated region
  $region10: #{_forward_jit.1} parent=0 // pred_check
    _
  $region11: #{_forward_jit.1} parent=0 // pred_check_branch
    %18 = sbr.rel (0) target = $region13
  $region12: #{_forward_jit.1} parent=0 // pred_region
    _
  $region13: #{_forward_jit.1} parent=0 // pred_fallthru
    _
  // Predicated region
  $region14: #{_forward_jit.1} parent=0 // pred_check
    _
  $region15: #{_forward_jit.1} parent=0 // pred_check_branch
    %20 = sbr.rel (0) target = $region17
  $region16: #{_forward_jit.1} parent=0 // pred_region
    _
  $region17: #{_forward_jit.1} parent=0 // pred_fallthru
    _
  // Predicated region
  $region18: #{_forward_jit.1} parent=0 // pred_check
    _
  $region19: #{_forward_jit.1} parent=0 // pred_check_branch
    %22 = sbr.rel (0) target = $region21
  $region20: #{_forward_jit.1} parent=0 // pred_region
    _
  $region21: #{_forward_jit.1} parent=0 // pred_fallthru
    _
  // Predicated region
  $region22: #{_forward_jit.1} parent=0 // pred_check
    _
  $region23: #{_forward_jit.1} parent=0 // pred_check_branch
    %24 = sbr.rel (0) target = $region25
  $region24: #{_forward_jit.1} parent=0 // pred_region
    _
  $region25: #{_forward_jit.1} parent=0 // pred_fallthru
    _
  // Predicated region
  $region26: #{_forward_jit.1} parent=0 // pred_check
    _
  $region27: #{_forward_jit.1} parent=0 // pred_check_branch
    %26 = sbr.rel (0) target = $region29
  $region28: #{_forward_jit.1} parent=0 // pred_region
    _
  $region29: #{_forward_jit.1} parent=0 // pred_fallthru
    _
  // Predicated region
  $region30: #{_forward_jit.1} parent=0 // pred_check
    _
  $region31: #{_forward_jit.1} parent=0 // pred_check_branch
    %28 = sbr.rel (0) target = $region33
  $region32: #{_forward_jit.1} parent=0 // pred_region
    _
  $region33: #{_forward_jit.1} parent=0 // pred_fallthru
    _
  %v29 = vld [vmem:[%s0] sm:$0xff]
  %v30 = vld [vmem:[%s0 + $0x8] sm:$0xff]
  %v31 = vld [vmem:[%s0 + $0x10] sm:$0xff]
  %v32 = vld [vmem:[%s0 + $0x18] sm:$0xff]
  %v33 = vld [vmem:[%s0 + $0x20] sm:$0xff]
  %v34 = vld [vmem:[%s0 + $0x28] sm:$0xff]
  %v35 = vld [vmem:[%s0 + $0x30] sm:$0xff]
  %v36 = vld [vmem:[%s0 + $0x38] sm:$0xff]
  %v37 = vld [vmem:[%s0 + $0x40] sm:$0xff]
  %v38 = vld [vmem:[%s0 + $0x48] sm:$0xff]
  %v39 = vld [vmem:[%s0 + $0x50] sm:$0xff]
  %v40 = vld [vmem:[%s0 + $0x58] sm:$0xff]
  %v41 = vld [vmem:[%s0 + $0x60] sm:$0xff]
  %v42 = vld [vmem:[%s0 + $0x68] sm:$0xff]
  %v43 = vld [vmem:[%s0 + $0x70] sm:$0xff]
  %v44 = vld [vmem:[%s0 + $0x78] sm:$0xff]
  %v45 = vld [vmem:[%s3] sm:$0xff]
  %v46 = vld [vmem:[%s3 + $0x8] sm:$0xff]
  %v47 = vld [vmem:[%s3 + $0x10] sm:$0xff]
  %v48 = vld [vmem:[%s3 + $0x18] sm:$0xff]
  %v49 = vld [vmem:[%s1] sm:$0xff]
  %v50 = vld [vmem:[%s1 + $0x8] sm:$0xff]
  %v51 = vld [vmem:[%s1 + $0x10] sm:$0xff]
  %v52 = vld [vmem:[%s1 + $0x18] sm:$0xff]
  %v53 = vld [vmem:[%s2] sm:$0x1]
  %v55 = vlaneseq
  %v56 = vshrl.u32 %v55, 7
  %v57 = vsub.s32 0, %v56
  %v58 = vrot.slane %v53, %v57
  %vm60 = vcmask 261120
  %v62 = vsel %vm60, %v29, 0
  %v65 = vsel %vm60, %v30, 0
  %v68 = vsel %vm60, %v31, 0
  %v71 = vsel %vm60, %v32, 0
  %v74 = vsel %vm60, %v33, 0
  %v77 = vsel %vm60, %v34, 0
  %v80 = vsel %vm60, %v35, 0
  %v83 = vsel %vm60, %v36, 0
  %v86 = vsel %vm60, %v37, 0
  %v89 = vsel %vm60, %v38, 0
  %v92 = vsel %vm60, %v39, 0
  %v95 = vsel %vm60, %v40, 0
  %v98 = vsel %vm60, %v41, 0
  %v101 = vsel %vm60, %v42, 0
  %v104 = vsel %vm60, %v43, 0
  %v107 = vsel %vm60, %v44, 0
  %109 = vmatprep.subr.mxu0 0.0
  %110 = vmatpush1.msra.mxu0 0.0
  %111 = vmatprep.subr.mxu0 0.0
  %112 = vmatpush1.msra.mxu0 0.0
  %113 = vmatprep.subr.mxu0 0.0
  %114 = vmatpush1.msra.mxu0 0.0
  %115 = vmatprep.subr.mxu0 0.0
  %116 = vmatpush1.msra.mxu0 0.0
  %117 = vmatprep.subr.mxu0 0.0
  %118 = vmatpush1.msra.mxu0 0.0
  %119 = vmatprep.subr.mxu0 0.0
  %120 = vmatpush1.msra.mxu0 0.0
  %121 = vmatprep.subr.mxu0 0.0
  %122 = vmatpush1.msra.mxu0 0.0
  %123 = vmatprep.subr.mxu0 0.0
  %124 = vmatpush1.msra.mxu0 0.0
  %125 = vmatprep.subr.mxu0 0.0
  %126 = vmatpush1.msra.mxu0 0.0
  %127 = vmatprep.subr.mxu0 0.0
  %128 = vmatpush1.msra.mxu0 0.0
  %129 = vmatprep.subr.mxu0 0.0
  %130 = vmatpush1.msra.mxu0 0.0
  %131 = vmatprep.subr.mxu0 0.0
  %132 = vmatpush1.msra.mxu0 0.0
  %133 = vmatprep.subr.mxu0 0.0
  %134 = vmatpush1.msra.mxu0 %v52
  %135 = vmatprep.subr.mxu0 0.0
  %136 = vmatpush1.msra.mxu0 %v51
  %137 = vmatprep.subr.mxu0 0.0
  %138 = vmatpush1.msra.mxu0 %v50
  %139 = vmatprep.subr.mxu0 0.0
  %140 = vmatpush1.msra.mxu0 %v49
  %141 = vmatprep.subr.mxu0 0.0
  %142 = vmatpush2.msra.mxu0 0.0
  %143 = vmatprep.subr.mxu0 0.0
  %144 = vmatpush2.msra.mxu0 0.0
  %145 = vmatprep.subr.mxu0 0.0
  %146 = vmatpush2.msra.mxu0 0.0
  %147 = vmatprep.subr.mxu0 0.0
  %148 = vmatpush2.msra.mxu0 0.0
  %149 = vmatprep.subr.mxu0 0.0
  %150 = vmatpush2.msra.mxu0 0.0
  %151 = vmatprep.subr.mxu0 0.0
  %152 = vmatpush2.msra.mxu0 0.0
  %153 = vmatprep.subr.mxu0 0.0
  %154 = vmatpush2.msra.mxu0 0.0
  %155 = vmatprep.subr.mxu0 0.0
  %156 = vmatpush2.msra.mxu0 0.0
  %157 = vmatprep.subr.mxu0 0.0
  %158 = vmatpush2.msra.mxu0 0.0
  %159 = vmatprep.subr.mxu0 0.0
  %160 = vmatpush2.msra.mxu0 0.0
  %161 = vmatprep.subr.mxu0 0.0
  %162 = vmatpush2.msra.mxu0 0.0
  %163 = vmatprep.subr.mxu0 0.0
  %164 = vmatpush2.msra.mxu0 0.0
  %165 = vmatprep.subr.mxu0 0.0
  %166 = vmatpush2.msra.mxu0 0.0
  %167 = vmatprep.subr.mxu0 0.0
  %168 = vmatpush2.msra.mxu0 0.0
  %169 = vmatprep.subr.mxu0 0.0
  %170 = vmatpush2.msra.mxu0 0.0
  %171 = vmatprep.subr.mxu0 0.0
  %172 = vmatpush2.msra.mxu0 0.0
  %173 = vmatprep.mubr.f32.mxu0 0.0
  %174 = vmatmul.mubr.f32.gmra.mxu0 %v62
  %v175 = vpop.f32.mrf.mxu0
  %v176 = vadd.f32 %v58, %v175
  %v177 = vpop.f32.mrf.mxu0
  %178 = vmatprep.mubr.f32.mxu0 0.0
  %179 = vmatmul.mubr.f32.gmra.mxu0 %v65
  %v180 = vpop.f32.mrf.mxu0
  %v181 = vadd.f32 %v58, %v180
  %v182 = vpop.f32.mrf.mxu0
  %183 = vmatprep.mubr.f32.mxu0 0.0
  %184 = vmatmul.mubr.f32.gmra.mxu0 %v68
  %v185 = vpop.f32.mrf.mxu0
  %v186 = vadd.f32 %v58, %v185
  %v187 = vpop.f32.mrf.mxu0
  %188 = vmatprep.mubr.f32.mxu0 0.0
  %189 = vmatmul.mubr.f32.gmra.mxu0 %v71
  %v190 = vpop.f32.mrf.mxu0
  %v191 = vadd.f32 %v58, %v190
  %v192 = vpop.f32.mrf.mxu0
  %193 = vmatprep.mubr.f32.mxu0 0.0
  %194 = vmatmul.mubr.f32.gmra.mxu0 %v74
  %v195 = vpop.f32.mrf.mxu0
  %v196 = vadd.f32 %v58, %v195
  %v197 = vpop.f32.mrf.mxu0
  %198 = vmatprep.mubr.f32.mxu0 0.0
  %199 = vmatmul.mubr.f32.gmra.mxu0 %v77
  %v200 = vpop.f32.mrf.mxu0
  %v201 = vadd.f32 %v58, %v200
  %v202 = vpop.f32.mrf.mxu0
  %203 = vmatprep.mubr.f32.mxu0 0.0
  %204 = vmatmul.mubr.f32.gmra.mxu0 %v80
  %v205 = vpop.f32.mrf.mxu0
  %v206 = vadd.f32 %v58, %v205
  %v207 = vpop.f32.mrf.mxu0
  %208 = vmatprep.mubr.f32.mxu0 0.0
  %209 = vmatmul.mubr.f32.gmra.mxu0 %v83
  %v210 = vpop.f32.mrf.mxu0
  %v211 = vadd.f32 %v58, %v210
  %v212 = vpop.f32.mrf.mxu0
  %213 = vmatprep.mubr.f32.mxu0 0.0
  %214 = vmatmul.mubr.f32.gmra.mxu0 %v86
  %v215 = vpop.f32.mrf.mxu0
  %v216 = vadd.f32 %v58, %v215
  %v217 = vpop.f32.mrf.mxu0
  %218 = vmatprep.mubr.f32.mxu0 0.0
  %219 = vmatmul.mubr.f32.gmra.mxu0 %v89
  %v220 = vpop.f32.mrf.mxu0
  %v221 = vadd.f32 %v58, %v220
  %v222 = vpop.f32.mrf.mxu0
  %223 = vmatprep.mubr.f32.mxu0 0.0
  %224 = vmatmul.mubr.f32.gmra.mxu0 %v92
  %v225 = vpop.f32.mrf.mxu0
  %v226 = vadd.f32 %v58, %v225
  %v227 = vpop.f32.mrf.mxu0
  %228 = vmatprep.mubr.f32.mxu0 0.0
  %229 = vmatmul.mubr.f32.gmra.mxu0 %v95
  %v230 = vpop.f32.mrf.mxu0
  %v231 = vadd.f32 %v58, %v230
  %v232 = vpop.f32.mrf.mxu0
  %233 = vmatprep.mubr.f32.mxu0 0.0
  %234 = vmatmul.mubr.f32.gmra.mxu0 %v98
  %v235 = vpop.f32.mrf.mxu0
  %v236 = vadd.f32 %v58, %v235
  %v237 = vpop.f32.mrf.mxu0
  %238 = vmatprep.mubr.f32.mxu0 0.0
  %239 = vmatmul.mubr.f32.gmra.mxu0 %v101
  %v240 = vpop.f32.mrf.mxu0
  %v241 = vadd.f32 %v58, %v240
  %v242 = vpop.f32.mrf.mxu0
  %243 = vmatprep.mubr.f32.mxu0 0.0
  %244 = vmatmul.mubr.f32.gmra.mxu0 %v104
  %v245 = vpop.f32.mrf.mxu0
  %v246 = vadd.f32 %v58, %v245
  %v247 = vpop.f32.mrf.mxu0
  %248 = vmatprep.mubr.f32.mxu0 0.0
  %249 = vmatmul.mubr.f32.gmra.mxu0 %v107
  %v250 = vpop.f32.mrf.mxu0
  %v251 = vadd.f32 %v58, %v250
  %v252 = vpop.f32.mrf.mxu0
  %253 = vdwg.mxu0
  %v255 = vsel %vm60, 0.0, 0
  %257 = vmatprep.subr.mxu0 0.0
  %258 = vmatpush1.msra.mxu0 0.0
  %259 = vmatprep.subr.mxu0 0.0
  %260 = vmatpush1.msra.mxu0 0.0
  %261 = vmatprep.subr.mxu0 0.0
  %262 = vmatpush1.msra.mxu0 0.0
  %263 = vmatprep.subr.mxu0 0.0
  %264 = vmatpush1.msra.mxu0 0.0
  %265 = vmatprep.subr.mxu0 0.0
  %266 = vmatpush1.msra.mxu0 0.0
  %267 = vmatprep.subr.mxu0 0.0
  %268 = vmatpush1.msra.mxu0 0.0
  %269 = vmatprep.subr.mxu0 0.0
  %270 = vmatpush1.msra.mxu0 0.0
  %271 = vmatprep.subr.mxu0 0.0
  %272 = vmatpush1.msra.mxu0 0.0
  %273 = vmatprep.subr.mxu0 0.0
  %274 = vmatpush1.msra.mxu0 0.0
  %275 = vmatprep.subr.mxu0 0.0
  %276 = vmatpush1.msra.mxu0 0.0
  %277 = vmatprep.subr.mxu0 0.0
  %278 = vmatpush1.msra.mxu0 0.0
  %279 = vmatprep.subr.mxu0 0.0
  %280 = vmatpush1.msra.mxu0 0.0
  %281 = vmatprep.subr.mxu0 0.0
  %282 = vmatpush1.msra.mxu0 %v48
  %283 = vmatprep.subr.mxu0 0.0
  %284 = vmatpush1.msra.mxu0 %v47
  %285 = vmatprep.subr.mxu0 0.0
  %286 = vmatpush1.msra.mxu0 %v46
  %287 = vmatprep.subr.mxu0 0.0
  %288 = vmatpush1.msra.mxu0 %v45
  %289 = vmatprep.subr.mxu0 0.0
  %290 = vmatpush2.msra.mxu0 0.0
  %291 = vmatprep.subr.mxu0 0.0
  %292 = vmatpush2.msra.mxu0 0.0
  %293 = vmatprep.subr.mxu0 0.0
  %294 = vmatpush2.msra.mxu0 0.0
  %295 = vmatprep.subr.mxu0 0.0
  %296 = vmatpush2.msra.mxu0 0.0
  %297 = vmatprep.subr.mxu0 0.0
  %298 = vmatpush2.msra.mxu0 0.0
  %299 = vmatprep.subr.mxu0 0.0
  %300 = vmatpush2.msra.mxu0 0.0
  %301 = vmatprep.subr.mxu0 0.0
  %302 = vmatpush2.msra.mxu0 0.0
  %303 = vmatprep.subr.mxu0 0.0
  %304 = vmatpush2.msra.mxu0 0.0
  %305 = vmatprep.subr.mxu0 0.0
  %306 = vmatpush2.msra.mxu0 0.0
  %307 = vmatprep.subr.mxu0 0.0
  %308 = vmatpush2.msra.mxu0 0.0
  %309 = vmatprep.subr.mxu0 0.0
  %310 = vmatpush2.msra.mxu0 0.0
  %311 = vmatprep.subr.mxu0 0.0
  %312 = vmatpush2.msra.mxu0 0.0
  %313 = vmatprep.subr.mxu0 0.0
  %314 = vmatpush2.msra.mxu0 0.0
  %315 = vmatprep.subr.mxu0 0.0
  %316 = vmatpush2.msra.mxu0 0.0
  %317 = vmatprep.subr.mxu0 0.0
  %318 = vmatpush2.msra.mxu0 0.0
  %319 = vmatprep.subr.mxu0 0.0
  %320 = vmatpush2.msra.mxu0 0.0
  %321 = vmatprep.mubr.f32.mxu0 0.0
  %322 = vmatmul.mubr.f32.gmra.mxu0 %v255
  %v323 = vpop.f32.mrf.mxu0
  %v324 = vadd.f32 0.0, %v323
  %v325 = vpop.f32.mrf.mxu0
  %326 = vdwg.mxu0
  %v327 = vadd.f32 %v176, %v324
  %v328 = vxor.u32 %v327, 2147483648
  %v329 = vmul.f32 %v328, 1.442695
  %v330 = vpow.pop %v329
  %v331 = vadd.f32 %v330, 1.0
  %v332 = vrcp.pop %v331
  %v333 = vmul.f32 1.0, %v332
  %v334 = vtanh.pop %v327
  %v335 = vmul.f32 %v333, 0.0
  %337 = vrot.lane.b32.xlu0 %v334, 64
  %v338 = vpop.permute.xlu0 %337
  %v340 = vmul.f32 %v333, %v338
  %342 = vrot.lane.b32.xlu0 %v340, 32
  %v343 = vpop.permute.xlu0 %342
  %v345 = vadd.f32 %v335, %v343
  %v346 = vtanh.pop %v345
  %348 = vrot.lane.b32.xlu0 %v346, 64
  %v349 = vpop.permute.xlu0 %348
  %v351 = vmul.f32 %v333, %v349
  %v352 = vadd.f32 %v351, 0.0
  %v353 = vadd.f32 %v181, %v324
  %v354 = vxor.u32 %v353, 2147483648
  %v355 = vmul.f32 %v354, 1.442695
  %v356 = vpow.pop %v355
  %v357 = vadd.f32 %v356, 1.0
  %v358 = vrcp.pop %v357
  %v359 = vmul.f32 1.0, %v358
  %v360 = vtanh.pop %v353
  %v361 = vmul.f32 %v359, 0.0
  %363 = vrot.lane.b32.xlu0 %v360, 64
  %v364 = vpop.permute.xlu0 %363
  %v366 = vmul.f32 %v359, %v364
  %368 = vrot.lane.b32.xlu0 %v366, 32
  %v369 = vpop.permute.xlu0 %368
  %v371 = vadd.f32 %v361, %v369
  %v372 = vtanh.pop %v371
  %374 = vrot.lane.b32.xlu0 %v372, 64
  %v375 = vpop.permute.xlu0 %374
  %v377 = vmul.f32 %v359, %v375
  %v378 = vadd.f32 %v377, 0.0
  %380 = vrot.lane.b32.xlu0 %v351, 32
  %v381 = vpop.permute.xlu0 %380
  %v382 = vsel %vm60, %v381, 0
  %384 = vmatprep.subr.mxu0 0.0
  %385 = vmatpush1.msra.mxu0 0.0
  %386 = vmatprep.subr.mxu0 0.0
  %387 = vmatpush1.msra.mxu0 0.0
  %388 = vmatprep.subr.mxu0 0.0
  %389 = vmatpush1.msra.mxu0 0.0
  %390 = vmatprep.subr.mxu0 0.0
  %391 = vmatpush1.msra.mxu0 0.0
  %392 = vmatprep.subr.mxu0 0.0
  %393 = vmatpush1.msra.mxu0 0.0
  %394 = vmatprep.subr.mxu0 0.0
  %395 = vmatpush1.msra.mxu0 0.0
  %396 = vmatprep.subr.mxu0 0.0
  %397 = vmatpush1.msra.mxu0 0.0
  %398 = vmatprep.subr.mxu0 0.0
  %399 = vmatpush1.msra.mxu0 0.0
  %400 = vmatprep.subr.mxu0 0.0
  %401 = vmatpush1.msra.mxu0 0.0
  %402 = vmatprep.subr.mxu0 0.0
  %403 = vmatpush1.msra.mxu0 0.0
  %404 = vmatprep.subr.mxu0 0.0
  %405 = vmatpush1.msra.mxu0 0.0
  %406 = vmatprep.subr.mxu0 0.0
  %407 = vmatpush1.msra.mxu0 0.0
  %408 = vmatprep.subr.mxu0 0.0
  %409 = vmatpush1.msra.mxu0 %v48
  %410 = vmatprep.subr.mxu0 0.0
  %411 = vmatpush1.msra.mxu0 %v47
  %412 = vmatprep.subr.mxu0 0.0
  %413 = vmatpush1.msra.mxu0 %v46
  %414 = vmatprep.subr.mxu0 0.0
  %415 = vmatpush1.msra.mxu0 %v45
  %416 = vmatprep.subr.mxu0 0.0
  %417 = vmatpush2.msra.mxu0 0.0
  %418 = vmatprep.subr.mxu0 0.0
  %419 = vmatpush2.msra.mxu0 0.0
  %420 = vmatprep.subr.mxu0 0.0
  %421 = vmatpush2.msra.mxu0 0.0
  %422 = vmatprep.subr.mxu0 0.0
  %423 = vmatpush2.msra.mxu0 0.0
  %424 = vmatprep.subr.mxu0 0.0
  %425 = vmatpush2.msra.mxu0 0.0
  %426 = vmatprep.subr.mxu0 0.0
  %427 = vmatpush2.msra.mxu0 0.0
  %428 = vmatprep.subr.mxu0 0.0
  %429 = vmatpush2.msra.mxu0 0.0
  %430 = vmatprep.subr.mxu0 0.0
  %431 = vmatpush2.msra.mxu0 0.0
  %432 = vmatprep.subr.mxu0 0.0
  %433 = vmatpush2.msra.mxu0 0.0
  %434 = vmatprep.subr.mxu0 0.0
  %435 = vmatpush2.msra.mxu0 0.0
  %436 = vmatprep.subr.mxu0 0.0
  %437 = vmatpush2.msra.mxu0 0.0
  %438 = vmatprep.subr.mxu0 0.0
  %439 = vmatpush2.msra.mxu0 0.0
  %440 = vmatprep.subr.mxu0 0.0
  %441 = vmatpush2.msra.mxu0 0.0
  %442 = vmatprep.subr.mxu0 0.0
  %443 = vmatpush2.msra.mxu0 0.0
  %444 = vmatprep.subr.mxu0 0.0
  %445 = vmatpush2.msra.mxu0 0.0
  %446 = vmatprep.subr.mxu0 0.0
  %447 = vmatpush2.msra.mxu0 0.0
  %448 = vmatprep.mubr.f32.mxu0 0.0
  %449 = vmatmul.mubr.f32.gmra.mxu0 %v382
  %v450 = vpop.f32.mrf.mxu0
  %v451 = vadd.f32 0.0, %v450
  %v452 = vpop.f32.mrf.mxu0
  %453 = vdwg.mxu0
  %v454 = vadd.f32 %v186, %v451
  %v455 = vxor.u32 %v454, 2147483648
  %v456 = vmul.f32 %v455, 1.442695
  %v457 = vpow.pop %v456
  %v458 = vadd.f32 %v457, 1.0
  %v459 = vrcp.pop %v458
  %v460 = vmul.f32 1.0, %v459
  %v461 = vtanh.pop %v454
  %v462 = vmul.f32 %v460, %v345
  %464 = vrot.lane.b32.xlu0 %v461, 64
  %v465 = vpop.permute.xlu0 %464
  %v467 = vmul.f32 %v460, %v465
  %469 = vrot.lane.b32.xlu0 %v467, 32
  %v470 = vpop.permute.xlu0 %469
  %v472 = vadd.f32 %v462, %v470
  %v473 = vtanh.pop %v472
  %475 = vrot.lane.b32.xlu0 %v473, 64
  %v476 = vpop.permute.xlu0 %475
  %v478 = vmul.f32 %v460, %v476
  %v479 = vadd.f32 %v352, %v478
  %481 = vrot.lane.b32.xlu0 %v377, 32
  %v482 = vpop.permute.xlu0 %481
  %v483 = vsel %vm60, %v482, 0
  %485 = vmatprep.subr.mxu0 0.0
  %486 = vmatpush1.msra.mxu0 0.0
  %487 = vmatprep.subr.mxu0 0.0
  %488 = vmatpush1.msra.mxu0 0.0
  %489 = vmatprep.subr.mxu0 0.0
  %490 = vmatpush1.msra.mxu0 0.0
  %491 = vmatprep.subr.mxu0 0.0
  %492 = vmatpush1.msra.mxu0 0.0
  %493 = vmatprep.subr.mxu0 0.0
  %494 = vmatpush1.msra.mxu0 0.0
  %495 = vmatprep.subr.mxu0 0.0
  %496 = vmatpush1.msra.mxu0 0.0
  %497 = vmatprep.subr.mxu0 0.0
  %498 = vmatpush1.msra.mxu0 0.0
  %499 = vmatprep.subr.mxu0 0.0
  %500 = vmatpush1.msra.mxu0 0.0
  %501 = vmatprep.subr.mxu0 0.0
  %502 = vmatpush1.msra.mxu0 0.0
  %503 = vmatprep.subr.mxu0 0.0
  %504 = vmatpush1.msra.mxu0 0.0
  %505 = vmatprep.subr.mxu0 0.0
  %506 = vmatpush1.msra.mxu0 0.0
  %507 = vmatprep.subr.mxu0 0.0
  %508 = vmatpush1.msra.mxu0 0.0
  %509 = vmatprep.subr.mxu0 0.0
  %510 = vmatpush1.msra.mxu0 %v48
  %511 = vmatprep.subr.mxu0 0.0
  %512 = vmatpush1.msra.mxu0 %v47
  %513 = vmatprep.subr.mxu0 0.0
  %514 = vmatpush1.msra.mxu0 %v46
  %515 = vmatprep.subr.mxu0 0.0
  %516 = vmatpush1.msra.mxu0 %v45
  %517 = vmatprep.subr.mxu0 0.0
  %518 = vmatpush2.msra.mxu0 0.0
  %519 = vmatprep.subr.mxu0 0.0
  %520 = vmatpush2.msra.mxu0 0.0
  %521 = vmatprep.subr.mxu0 0.0
  %522 = vmatpush2.msra.mxu0 0.0
  %523 = vmatprep.subr.mxu0 0.0
  %524 = vmatpush2.msra.mxu0 0.0
  %525 = vmatprep.subr.mxu0 0.0
  %526 = vmatpush2.msra.mxu0 0.0
  %527 = vmatprep.subr.mxu0 0.0
  %528 = vmatpush2.msra.mxu0 0.0
  %529 = vmatprep.subr.mxu0 0.0
  %530 = vmatpush2.msra.mxu0 0.0
  %531 = vmatprep.subr.mxu0 0.0
  %532 = vmatpush2.msra.mxu0 0.0
  %533 = vmatprep.subr.mxu0 0.0
  %534 = vmatpush2.msra.mxu0 0.0
  %535 = vmatprep.subr.mxu0 0.0
  %536 = vmatpush2.msra.mxu0 0.0
  %537 = vmatprep.subr.mxu0 0.0
  %538 = vmatpush2.msra.mxu0 0.0
  %539 = vmatprep.subr.mxu0 0.0
  %540 = vmatpush2.msra.mxu0 0.0
  %541 = vmatprep.subr.mxu0 0.0
  %542 = vmatpush2.msra.mxu0 0.0
  %543 = vmatprep.subr.mxu0 0.0
  %544 = vmatpush2.msra.mxu0 0.0
  %545 = vmatprep.subr.mxu0 0.0
  %546 = vmatpush2.msra.mxu0 0.0
  %547 = vmatprep.subr.mxu0 0.0
  %548 = vmatpush2.msra.mxu0 0.0
  %549 = vmatprep.mubr.f32.mxu0 0.0
  %550 = vmatmul.mubr.f32.gmra.mxu0 %v483
  %v551 = vpop.f32.mrf.mxu0
  %v552 = vadd.f32 0.0, %v551
  %v553 = vpop.f32.mrf.mxu0
  %554 = vdwg.mxu0
  %v555 = vadd.f32 %v191, %v552
  %v556 = vxor.u32 %v555, 2147483648
  %v557 = vmul.f32 %v556, 1.442695
  %v558 = vpow.pop %v557
  %v559 = vadd.f32 %v558, 1.0
  %v560 = vrcp.pop %v559
  %v561 = vmul.f32 1.0, %v560
  %v562 = vtanh.pop %v555
  %v563 = vmul.f32 %v561, %v371
  %565 = vrot.lane.b32.xlu0 %v562, 64
  %v566 = vpop.permute.xlu0 %565
  %v568 = vmul.f32 %v561, %v566
  %570 = vrot.lane.b32.xlu0 %v568, 32
  %v571 = vpop.permute.xlu0 %570
  %v573 = vadd.f32 %v563, %v571
  %v574 = vtanh.pop %v573
  %576 = vrot.lane.b32.xlu0 %v574, 64
  %v577 = vpop.permute.xlu0 %576
  %v579 = vmul.f32 %v561, %v577
  %v580 = vadd.f32 %v378, %v579
  %582 = vrot.lane.b32.xlu0 %v478, 32
  %v583 = vpop.permute.xlu0 %582
  %v584 = vsel %vm60, %v583, 0
  %586 = vmatprep.subr.mxu0 0.0
  %587 = vmatpush1.msra.mxu0 0.0
  %588 = vmatprep.subr.mxu0 0.0
  %589 = vmatpush1.msra.mxu0 0.0
  %590 = vmatprep.subr.mxu0 0.0
  %591 = vmatpush1.msra.mxu0 0.0
  %592 = vmatprep.subr.mxu0 0.0
  %593 = vmatpush1.msra.mxu0 0.0
  %594 = vmatprep.subr.mxu0 0.0
  %595 = vmatpush1.msra.mxu0 0.0
  %596 = vmatprep.subr.mxu0 0.0
  %597 = vmatpush1.msra.mxu0 0.0
  %598 = vmatprep.subr.mxu0 0.0
  %599 = vmatpush1.msra.mxu0 0.0
  %600 = vmatprep.subr.mxu0 0.0
  %601 = vmatpush1.msra.mxu0 0.0
  %602 = vmatprep.subr.mxu0 0.0
  %603 = vmatpush1.msra.mxu0 0.0
  %604 = vmatprep.subr.mxu0 0.0
  %605 = vmatpush1.msra.mxu0 0.0
  %606 = vmatprep.subr.mxu0 0.0
  %607 = vmatpush1.msra.mxu0 0.0
  %608 = vmatprep.subr.mxu0 0.0
  %609 = vmatpush1.msra.mxu0 0.0
  %610 = vmatprep.subr.mxu0 0.0
  %611 = vmatpush1.msra.mxu0 %v48
  %612 = vmatprep.subr.mxu0 0.0
  %613 = vmatpush1.msra.mxu0 %v47
  %614 = vmatprep.subr.mxu0 0.0
  %615 = vmatpush1.msra.mxu0 %v46
  %616 = vmatprep.subr.mxu0 0.0
  %617 = vmatpush1.msra.mxu0 %v45
  %618 = vmatprep.subr.mxu0 0.0
  %619 = vmatpush2.msra.mxu0 0.0
  %620 = vmatprep.subr.mxu0 0.0
  %621 = vmatpush2.msra.mxu0 0.0
  %622 = vmatprep.subr.mxu0 0.0
  %623 = vmatpush2.msra.mxu0 0.0
  %624 = vmatprep.subr.mxu0 0.0
  %625 = vmatpush2.msra.mxu0 0.0
  %626 = vmatprep.subr.mxu0 0.0
  %627 = vmatpush2.msra.mxu0 0.0
  %628 = vmatprep.subr.mxu0 0.0
  %629 = vmatpush2.msra.mxu0 0.0
  %630 = vmatprep.subr.mxu0 0.0
  %631 = vmatpush2.msra.mxu0 0.0
  %632 = vmatprep.subr.mxu0 0.0
  %633 = vmatpush2.msra.mxu0 0.0
  %634 = vmatprep.subr.mxu0 0.0
  %635 = vmatpush2.msra.mxu0 0.0
  %636 = vmatprep.subr.mxu0 0.0
  %637 = vmatpush2.msra.mxu0 0.0
  %638 = vmatprep.subr.mxu0 0.0
  %639 = vmatpush2.msra.mxu0 0.0
  %640 = vmatprep.subr.mxu0 0.0
  %641 = vmatpush2.msra.mxu0 0.0
  %642 = vmatprep.subr.mxu0 0.0
  %643 = vmatpush2.msra.mxu0 0.0
  %644 = vmatprep.subr.mxu0 0.0
  %645 = vmatpush2.msra.mxu0 0.0
  %646 = vmatprep.subr.mxu0 0.0
  %647 = vmatpush2.msra.mxu0 0.0
  %648 = vmatprep.subr.mxu0 0.0
  %649 = vmatpush2.msra.mxu0 0.0
  %650 = vmatprep.mubr.f32.mxu0 0.0
  %651 = vmatmul.mubr.f32.gmra.mxu0 %v584
  %v652 = vpop.f32.mrf.mxu0
  %v653 = vadd.f32 0.0, %v652
  %v654 = vpop.f32.mrf.mxu0
  %655 = vdwg.mxu0
  %v656 = vadd.f32 %v196, %v653
  %v657 = vxor.u32 %v656, 2147483648
  %v658 = vmul.f32 %v657, 1.442695
  %v659 = vpow.pop %v658
  %v660 = vadd.f32 %v659, 1.0
  %v661 = vrcp.pop %v660
  %v662 = vmul.f32 1.0, %v661
  %v663 = vtanh.pop %v656
  %v664 = vmul.f32 %v662, %v472
  %666 = vrot.lane.b32.xlu0 %v663, 64
  %v667 = vpop.permute.xlu0 %666
  %v669 = vmul.f32 %v662, %v667
  %671 = vrot.lane.b32.xlu0 %v669, 32
  %v672 = vpop.permute.xlu0 %671
  %v674 = vadd.f32 %v664, %v672
  %v675 = vtanh.pop %v674
  %677 = vrot.lane.b32.xlu0 %v675, 64
  %v678 = vpop.permute.xlu0 %677
  %v680 = vmul.f32 %v662, %v678
  %v681 = vadd.f32 %v479, %v680
  %683 = vrot.lane.b32.xlu0 %v579, 32
  %v684 = vpop.permute.xlu0 %683
  %v685 = vsel %vm60, %v684, 0
  %687 = vmatprep.subr.mxu0 0.0
  %688 = vmatpush1.msra.mxu0 0.0
  %689 = vmatprep.subr.mxu0 0.0
  %690 = vmatpush1.msra.mxu0 0.0
  %691 = vmatprep.subr.mxu0 0.0
  %692 = vmatpush1.msra.mxu0 0.0
  %693 = vmatprep.subr.mxu0 0.0
  %694 = vmatpush1.msra.mxu0 0.0
  %695 = vmatprep.subr.mxu0 0.0
  %696 = vmatpush1.msra.mxu0 0.0
  %697 = vmatprep.subr.mxu0 0.0
  %698 = vmatpush1.msra.mxu0 0.0
  %699 = vmatprep.subr.mxu0 0.0
  %700 = vmatpush1.msra.mxu0 0.0
  %701 = vmatprep.subr.mxu0 0.0
  %702 = vmatpush1.msra.mxu0 0.0
  %703 = vmatprep.subr.mxu0 0.0
  %704 = vmatpush1.msra.mxu0 0.0
  %705 = vmatprep.subr.mxu0 0.0
  %706 = vmatpush1.msra.mxu0 0.0
  %707 = vmatprep.subr.mxu0 0.0
  %708 = vmatpush1.msra.mxu0 0.0
  %709 = vmatprep.subr.mxu0 0.0
  %710 = vmatpush1.msra.mxu0 0.0
  %711 = vmatprep.subr.mxu0 0.0
  %712 = vmatpush1.msra.mxu0 %v48
  %713 = vmatprep.subr.mxu0 0.0
  %714 = vmatpush1.msra.mxu0 %v47
  %715 = vmatprep.subr.mxu0 0.0
  %716 = vmatpush1.msra.mxu0 %v46
  %717 = vmatprep.subr.mxu0 0.0
  %718 = vmatpush1.msra.mxu0 %v45
  %719 = vmatprep.subr.mxu0 0.0
  %720 = vmatpush2.msra.mxu0 0.0
  %721 = vmatprep.subr.mxu0 0.0
  %722 = vmatpush2.msra.mxu0 0.0
  %723 = vmatprep.subr.mxu0 0.0
  %724 = vmatpush2.msra.mxu0 0.0
  %725 = vmatprep.subr.mxu0 0.0
  %726 = vmatpush2.msra.mxu0 0.0
  %727 = vmatprep.subr.mxu0 0.0
  %728 = vmatpush2.msra.mxu0 0.0
  %729 = vmatprep.subr.mxu0 0.0
  %730 = vmatpush2.msra.mxu0 0.0
  %731 = vmatprep.subr.mxu0 0.0
  %732 = vmatpush2.msra.mxu0 0.0
  %733 = vmatprep.subr.mxu0 0.0
  %734 = vmatpush2.msra.mxu0 0.0
  %735 = vmatprep.subr.mxu0 0.0
  %736 = vmatpush2.msra.mxu0 0.0
  %737 = vmatprep.subr.mxu0 0.0
  %738 = vmatpush2.msra.mxu0 0.0
  %739 = vmatprep.subr.mxu0 0.0
  %740 = vmatpush2.msra.mxu0 0.0
  %741 = vmatprep.subr.mxu0 0.0
  %742 = vmatpush2.msra.mxu0 0.0
  %743 = vmatprep.subr.mxu0 0.0
  %744 = vmatpush2.msra.mxu0 0.0
  %745 = vmatprep.subr.mxu0 0.0
  %746 = vmatpush2.msra.mxu0 0.0
  %747 = vmatprep.subr.mxu0 0.0
  %748 = vmatpush2.msra.mxu0 0.0
  %749 = vmatprep.subr.mxu0 0.0
  %750 = vmatpush2.msra.mxu0 0.0
  %751 = vmatprep.mubr.f32.mxu0 0.0
  %752 = vmatmul.mubr.f32.gmra.mxu0 %v685
  %v753 = vpop.f32.mrf.mxu0
  %v754 = vadd.f32 0.0, %v753
  %v755 = vpop.f32.mrf.mxu0
  %756 = vdwg.mxu0
  %v757 = vadd.f32 %v201, %v754
  %v758 = vxor.u32 %v757, 2147483648
  %v759 = vmul.f32 %v758, 1.442695
  %v760 = vpow.pop %v759
  %v761 = vadd.f32 %v760, 1.0
  %v762 = vrcp.pop %v761
  %v763 = vmul.f32 1.0, %v762
  %v764 = vtanh.pop %v757
  %v765 = vmul.f32 %v763, %v573
  %767 = vrot.lane.b32.xlu0 %v764, 64
  %v768 = vpop.permute.xlu0 %767
  %v770 = vmul.f32 %v763, %v768
  %772 = vrot.lane.b32.xlu0 %v770, 32
  %v773 = vpop.permute.xlu0 %772
  %v775 = vadd.f32 %v765, %v773
  %v776 = vtanh.pop %v775
  %778 = vrot.lane.b32.xlu0 %v776, 64
  %v779 = vpop.permute.xlu0 %778
  %v781 = vmul.f32 %v763, %v779
  %v782 = vadd.f32 %v580, %v781
  %784 = vrot.lane.b32.xlu0 %v680, 32
  %v785 = vpop.permute.xlu0 %784
  %v786 = vsel %vm60, %v785, 0
  %788 = vmatprep.subr.mxu0 0.0
  %789 = vmatpush1.msra.mxu0 0.0
  %790 = vmatprep.subr.mxu0 0.0
  %791 = vmatpush1.msra.mxu0 0.0
  %792 = vmatprep.subr.mxu0 0.0
  %793 = vmatpush1.msra.mxu0 0.0
  %794 = vmatprep.subr.mxu0 0.0
  %795 = vmatpush1.msra.mxu0 0.0
  %796 = vmatprep.subr.mxu0 0.0
  %797 = vmatpush1.msra.mxu0 0.0
  %798 = vmatprep.subr.mxu0 0.0
  %799 = vmatpush1.msra.mxu0 0.0
  %800 = vmatprep.subr.mxu0 0.0
  %801 = vmatpush1.msra.mxu0 0.0
  %802 = vmatprep.subr.mxu0 0.0
  %803 = vmatpush1.msra.mxu0 0.0
  %804 = vmatprep.subr.mxu0 0.0
  %805 = vmatpush1.msra.mxu0 0.0
  %806 = vmatprep.subr.mxu0 0.0
  %807 = vmatpush1.msra.mxu0 0.0
  %808 = vmatprep.subr.mxu0 0.0
  %809 = vmatpush1.msra.mxu0 0.0
  %810 = vmatprep.subr.mxu0 0.0
  %811 = vmatpush1.msra.mxu0 0.0
  %812 = vmatprep.subr.mxu0 0.0
  %813 = vmatpush1.msra.mxu0 %v48
  %814 = vmatprep.subr.mxu0 0.0
  %815 = vmatpush1.msra.mxu0 %v47
  %816 = vmatprep.subr.mxu0 0.0
  %817 = vmatpush1.msra.mxu0 %v46
  %818 = vmatprep.subr.mxu0 0.0
  %819 = vmatpush1.msra.mxu0 %v45
  %820 = vmatprep.subr.mxu0 0.0
  %821 = vmatpush2.msra.mxu0 0.0
  %822 = vmatprep.subr.mxu0 0.0
  %823 = vmatpush2.msra.mxu0 0.0
  %824 = vmatprep.subr.mxu0 0.0
  %825 = vmatpush2.msra.mxu0 0.0
  %826 = vmatprep.subr.mxu0 0.0
  %827 = vmatpush2.msra.mxu0 0.0
  %828 = vmatprep.subr.mxu0 0.0
  %829 = vmatpush2.msra.mxu0 0.0
  %830 = vmatprep.subr.mxu0 0.0
  %831 = vmatpush2.msra.mxu0 0.0
  %832 = vmatprep.subr.mxu0 0.0
  %833 = vmatpush2.msra.mxu0 0.0
  %834 = vmatprep.subr.mxu0 0.0
  %835 = vmatpush2.msra.mxu0 0.0
  %836 = vmatprep.subr.mxu0 0.0
  %837 = vmatpush2.msra.mxu0 0.0
  %838 = vmatprep.subr.mxu0 0.0
  %839 = vmatpush2.msra.mxu0 0.0
  %840 = vmatprep.subr.mxu0 0.0
  %841 = vmatpush2.msra.mxu0 0.0
  %842 = vmatprep.subr.mxu0 0.0
  %843 = vmatpush2.msra.mxu0 0.0
  %844 = vmatprep.subr.mxu0 0.0
  %845 = vmatpush2.msra.mxu0 0.0
  %846 = vmatprep.subr.mxu0 0.0
  %847 = vmatpush2.msra.mxu0 0.0
  %848 = vmatprep.subr.mxu0 0.0
  %849 = vmatpush2.msra.mxu0 0.0
  %850 = vmatprep.subr.mxu0 0.0
  %851 = vmatpush2.msra.mxu0 0.0
  %852 = vmatprep.mubr.f32.mxu0 0.0
  %853 = vmatmul.mubr.f32.gmra.mxu0 %v786
  %v854 = vpop.f32.mrf.mxu0
  %v855 = vadd.f32 0.0, %v854
  %v856 = vpop.f32.mrf.mxu0
  %857 = vdwg.mxu0
  %v858 = vadd.f32 %v206, %v855
  %v859 = vxor.u32 %v858, 2147483648
  %v860 = vmul.f32 %v859, 1.442695
  %v861 = vpow.pop %v860
  %v862 = vadd.f32 %v861, 1.0
  %v863 = vrcp.pop %v862
  %v864 = vmul.f32 1.0, %v863
  %v865 = vtanh.pop %v858
  %v866 = vmul.f32 %v864, %v674
  %868 = vrot.lane.b32.xlu0 %v865, 64
  %v869 = vpop.permute.xlu0 %868
  %v871 = vmul.f32 %v864, %v869
  %873 = vrot.lane.b32.xlu0 %v871, 32
  %v874 = vpop.permute.xlu0 %873
  %v876 = vadd.f32 %v866, %v874
  %v877 = vtanh.pop %v876
  %879 = vrot.lane.b32.xlu0 %v877, 64
  %v880 = vpop.permute.xlu0 %879
  %v882 = vmul.f32 %v864, %v880
  %v883 = vadd.f32 %v681, %v882
  %885 = vrot.lane.b32.xlu0 %v781, 32
  %v886 = vpop.permute.xlu0 %885
  %v887 = vsel %vm60, %v886, 0
  %889 = vmatprep.subr.mxu0 0.0
  %890 = vmatpush1.msra.mxu0 0.0
  %891 = vmatprep.subr.mxu0 0.0
  %892 = vmatpush1.msra.mxu0 0.0
  %893 = vmatprep.subr.mxu0 0.0
  %894 = vmatpush1.msra.mxu0 0.0
  %895 = vmatprep.subr.mxu0 0.0
  %896 = vmatpush1.msra.mxu0 0.0
  %897 = vmatprep.subr.mxu0 0.0
  %898 = vmatpush1.msra.mxu0 0.0
  %899 = vmatprep.subr.mxu0 0.0
  %900 = vmatpush1.msra.mxu0 0.0
  %901 = vmatprep.subr.mxu0 0.0
  %902 = vmatpush1.msra.mxu0 0.0
  %903 = vmatprep.subr.mxu0 0.0
  %904 = vmatpush1.msra.mxu0 0.0
  %905 = vmatprep.subr.mxu0 0.0
  %906 = vmatpush1.msra.mxu0 0.0
  %907 = vmatprep.subr.mxu0 0.0
  %908 = vmatpush1.msra.mxu0 0.0
  %909 = vmatprep.subr.mxu0 0.0
  %910 = vmatpush1.msra.mxu0 0.0
  %911 = vmatprep.subr.mxu0 0.0
  %912 = vmatpush1.msra.mxu0 0.0
  %913 = vmatprep.subr.mxu0 0.0
  %914 = vmatpush1.msra.mxu0 %v48
  %915 = vmatprep.subr.mxu0 0.0
  %916 = vmatpush1.msra.mxu0 %v47
  %917 = vmatprep.subr.mxu0 0.0
  %918 = vmatpush1.msra.mxu0 %v46
  %919 = vmatprep.subr.mxu0 0.0
  %920 = vmatpush1.msra.mxu0 %v45
  %921 = vmatprep.subr.mxu0 0.0
  %922 = vmatpush2.msra.mxu0 0.0
  %923 = vmatprep.subr.mxu0 0.0
  %924 = vmatpush2.msra.mxu0 0.0
  %925 = vmatprep.subr.mxu0 0.0
  %926 = vmatpush2.msra.mxu0 0.0
  %927 = vmatprep.subr.mxu0 0.0
  %928 = vmatpush2.msra.mxu0 0.0
  %929 = vmatprep.subr.mxu0 0.0
  %930 = vmatpush2.msra.mxu0 0.0
  %931 = vmatprep.subr.mxu0 0.0
  %932 = vmatpush2.msra.mxu0 0.0
  %933 = vmatprep.subr.mxu0 0.0
  %934 = vmatpush2.msra.mxu0 0.0
  %935 = vmatprep.subr.mxu0 0.0
  %936 = vmatpush2.msra.mxu0 0.0
  %937 = vmatprep.subr.mxu0 0.0
  %938 = vmatpush2.msra.mxu0 0.0
  %939 = vmatprep.subr.mxu0 0.0
  %940 = vmatpush2.msra.mxu0 0.0
  %941 = vmatprep.subr.mxu0 0.0
  %942 = vmatpush2.msra.mxu0 0.0
  %943 = vmatprep.subr.mxu0 0.0
  %944 = vmatpush2.msra.mxu0 0.0
  %945 = vmatprep.subr.mxu0 0.0
  %946 = vmatpush2.msra.mxu0 0.0
  %947 = vmatprep.subr.mxu0 0.0
  %948 = vmatpush2.msra.mxu0 0.0
  %949 = vmatprep.subr.mxu0 0.0
  %950 = vmatpush2.msra.mxu0 0.0
  %951 = vmatprep.subr.mxu0 0.0
  %952 = vmatpush2.msra.mxu0 0.0
  %953 = vmatprep.mubr.f32.mxu0 0.0
  %954 = vmatmul.mubr.f32.gmra.mxu0 %v887
  %v955 = vpop.f32.mrf.mxu0
  %v956 = vadd.f32 0.0, %v955
  %v957 = vpop.f32.mrf.mxu0
  %958 = vdwg.mxu0
  %v959 = vadd.f32 %v211, %v956
  %v960 = vxor.u32 %v959, 2147483648
  %v961 = vmul.f32 %v960, 1.442695
  %v962 = vpow.pop %v961
  %v963 = vadd.f32 %v962, 1.0
  %v964 = vrcp.pop %v963
  %v965 = vmul.f32 1.0, %v964
  %v966 = vtanh.pop %v959
  %v967 = vmul.f32 %v965, %v775
  %969 = vrot.lane.b32.xlu0 %v966, 64
  %v970 = vpop.permute.xlu0 %969
  %v972 = vmul.f32 %v965, %v970
  %974 = vrot.lane.b32.xlu0 %v972, 32
  %v975 = vpop.permute.xlu0 %974
  %v977 = vadd.f32 %v967, %v975
  %v978 = vtanh.pop %v977
  %980 = vrot.lane.b32.xlu0 %v978, 64
  %v981 = vpop.permute.xlu0 %980
  %v983 = vmul.f32 %v965, %v981
  %v984 = vadd.f32 %v782, %v983
  %986 = vrot.lane.b32.xlu0 %v882, 32
  %v987 = vpop.permute.xlu0 %986
  %v988 = vsel %vm60, %v987, 0
  %990 = vmatprep.subr.mxu0 0.0
  %991 = vmatpush1.msra.mxu0 0.0
  %992 = vmatprep.subr.mxu0 0.0
  %993 = vmatpush1.msra.mxu0 0.0
  %994 = vmatprep.subr.mxu0 0.0
  %995 = vmatpush1.msra.mxu0 0.0
  %996 = vmatprep.subr.mxu0 0.0
  %997 = vmatpush1.msra.mxu0 0.0
  %998 = vmatprep.subr.mxu0 0.0
  %999 = vmatpush1.msra.mxu0 0.0
  %1000 = vmatprep.subr.mxu0 0.0
  %1001 = vmatpush1.msra.mxu0 0.0
  %1002 = vmatprep.subr.mxu0 0.0
  %1003 = vmatpush1.msra.mxu0 0.0
  %1004 = vmatprep.subr.mxu0 0.0
  %1005 = vmatpush1.msra.mxu0 0.0
  %1006 = vmatprep.subr.mxu0 0.0
  %1007 = vmatpush1.msra.mxu0 0.0
  %1008 = vmatprep.subr.mxu0 0.0
  %1009 = vmatpush1.msra.mxu0 0.0
  %1010 = vmatprep.subr.mxu0 0.0
  %1011 = vmatpush1.msra.mxu0 0.0
  %1012 = vmatprep.subr.mxu0 0.0
  %1013 = vmatpush1.msra.mxu0 0.0
  %1014 = vmatprep.subr.mxu0 0.0
  %1015 = vmatpush1.msra.mxu0 %v48
  %1016 = vmatprep.subr.mxu0 0.0
  %1017 = vmatpush1.msra.mxu0 %v47
  %1018 = vmatprep.subr.mxu0 0.0
  %1019 = vmatpush1.msra.mxu0 %v46
  %1020 = vmatprep.subr.mxu0 0.0
  %1021 = vmatpush1.msra.mxu0 %v45
  %1022 = vmatprep.subr.mxu0 0.0
  %1023 = vmatpush2.msra.mxu0 0.0
  %1024 = vmatprep.subr.mxu0 0.0
  %1025 = vmatpush2.msra.mxu0 0.0
  %1026 = vmatprep.subr.mxu0 0.0
  %1027 = vmatpush2.msra.mxu0 0.0
  %1028 = vmatprep.subr.mxu0 0.0
  %1029 = vmatpush2.msra.mxu0 0.0
  %1030 = vmatprep.subr.mxu0 0.0
  %1031 = vmatpush2.msra.mxu0 0.0
  %1032 = vmatprep.subr.mxu0 0.0
  %1033 = vmatpush2.msra.mxu0 0.0
  %1034 = vmatprep.subr.mxu0 0.0
  %1035 = vmatpush2.msra.mxu0 0.0
  %1036 = vmatprep.subr.mxu0 0.0
  %1037 = vmatpush2.msra.mxu0 0.0
  %1038 = vmatprep.subr.mxu0 0.0
  %1039 = vmatpush2.msra.mxu0 0.0
  %1040 = vmatprep.subr.mxu0 0.0
  %1041 = vmatpush2.msra.mxu0 0.0
  %1042 = vmatprep.subr.mxu0 0.0
  %1043 = vmatpush2.msra.mxu0 0.0
  %1044 = vmatprep.subr.mxu0 0.0
  %1045 = vmatpush2.msra.mxu0 0.0
  %1046 = vmatprep.subr.mxu0 0.0
  %1047 = vmatpush2.msra.mxu0 0.0
  %1048 = vmatprep.subr.mxu0 0.0
  %1049 = vmatpush2.msra.mxu0 0.0
  %1050 = vmatprep.subr.mxu0 0.0
  %1051 = vmatpush2.msra.mxu0 0.0
  %1052 = vmatprep.subr.mxu0 0.0
  %1053 = vmatpush2.msra.mxu0 0.0
  %1054 = vmatprep.mubr.f32.mxu0 0.0
  %1055 = vmatmul.mubr.f32.gmra.mxu0 %v988
  %v1056 = vpop.f32.mrf.mxu0
  %v1057 = vadd.f32 0.0, %v1056
  %v1058 = vpop.f32.mrf.mxu0
  %1059 = vdwg.mxu0
  %v1060 = vadd.f32 %v216, %v1057
  %v1061 = vxor.u32 %v1060, 2147483648
  %v1062 = vmul.f32 %v1061, 1.442695
  %v1063 = vpow.pop %v1062
  %v1064 = vadd.f32 %v1063, 1.0
  %v1065 = vrcp.pop %v1064
  %v1066 = vmul.f32 1.0, %v1065
  %v1067 = vtanh.pop %v1060
  %v1068 = vmul.f32 %v1066, %v876
  %1070 = vrot.lane.b32.xlu0 %v1067, 64
  %v1071 = vpop.permute.xlu0 %1070
  %v1073 = vmul.f32 %v1066, %v1071
  %1075 = vrot.lane.b32.xlu0 %v1073, 32
  %v1076 = vpop.permute.xlu0 %1075
  %v1078 = vadd.f32 %v1068, %v1076
  %v1079 = vtanh.pop %v1078
  %1081 = vrot.lane.b32.xlu0 %v1079, 64
  %v1082 = vpop.permute.xlu0 %1081
  %v1084 = vmul.f32 %v1066, %v1082
  %v1085 = vadd.f32 %v883, %v1084
  %1087 = vrot.lane.b32.xlu0 %v983, 32
  %v1088 = vpop.permute.xlu0 %1087
  %v1089 = vsel %vm60, %v1088, 0
  %1091 = vmatprep.subr.mxu0 0.0
  %1092 = vmatpush1.msra.mxu0 0.0
  %1093 = vmatprep.subr.mxu0 0.0
  %1094 = vmatpush1.msra.mxu0 0.0
  %1095 = vmatprep.subr.mxu0 0.0
  %1096 = vmatpush1.msra.mxu0 0.0
  %1097 = vmatprep.subr.mxu0 0.0
  %1098 = vmatpush1.msra.mxu0 0.0
  %1099 = vmatprep.subr.mxu0 0.0
  %1100 = vmatpush1.msra.mxu0 0.0
  %1101 = vmatprep.subr.mxu0 0.0
  %1102 = vmatpush1.msra.mxu0 0.0
  %1103 = vmatprep.subr.mxu0 0.0
  %1104 = vmatpush1.msra.mxu0 0.0
  %1105 = vmatprep.subr.mxu0 0.0
  %1106 = vmatpush1.msra.mxu0 0.0
  %1107 = vmatprep.subr.mxu0 0.0
  %1108 = vmatpush1.msra.mxu0 0.0
  %1109 = vmatprep.subr.mxu0 0.0
  %1110 = vmatpush1.msra.mxu0 0.0
  %1111 = vmatprep.subr.mxu0 0.0
  %1112 = vmatpush1.msra.mxu0 0.0
  %1113 = vmatprep.subr.mxu0 0.0
  %1114 = vmatpush1.msra.mxu0 0.0
  %1115 = vmatprep.subr.mxu0 0.0
  %1116 = vmatpush1.msra.mxu0 %v48
  %1117 = vmatprep.subr.mxu0 0.0
  %1118 = vmatpush1.msra.mxu0 %v47
  %1119 = vmatprep.subr.mxu0 0.0
  %1120 = vmatpush1.msra.mxu0 %v46
  %1121 = vmatprep.subr.mxu0 0.0
  %1122 = vmatpush1.msra.mxu0 %v45
  %1123 = vmatprep.subr.mxu0 0.0
  %1124 = vmatpush2.msra.mxu0 0.0
  %1125 = vmatprep.subr.mxu0 0.0
  %1126 = vmatpush2.msra.mxu0 0.0
  %1127 = vmatprep.subr.mxu0 0.0
  %1128 = vmatpush2.msra.mxu0 0.0
  %1129 = vmatprep.subr.mxu0 0.0
  %1130 = vmatpush2.msra.mxu0 0.0
  %1131 = vmatprep.subr.mxu0 0.0
  %1132 = vmatpush2.msra.mxu0 0.0
  %1133 = vmatprep.subr.mxu0 0.0
  %1134 = vmatpush2.msra.mxu0 0.0
  %1135 = vmatprep.subr.mxu0 0.0
  %1136 = vmatpush2.msra.mxu0 0.0
  %1137 = vmatprep.subr.mxu0 0.0
  %1138 = vmatpush2.msra.mxu0 0.0
  %1139 = vmatprep.subr.mxu0 0.0
  %1140 = vmatpush2.msra.mxu0 0.0
  %1141 = vmatprep.subr.mxu0 0.0
  %1142 = vmatpush2.msra.mxu0 0.0
  %1143 = vmatprep.subr.mxu0 0.0
  %1144 = vmatpush2.msra.mxu0 0.0
  %1145 = vmatprep.subr.mxu0 0.0
  %1146 = vmatpush2.msra.mxu0 0.0
  %1147 = vmatprep.subr.mxu0 0.0
  %1148 = vmatpush2.msra.mxu0 0.0
  %1149 = vmatprep.subr.mxu0 0.0
  %1150 = vmatpush2.msra.mxu0 0.0
  %1151 = vmatprep.subr.mxu0 0.0
  %1152 = vmatpush2.msra.mxu0 0.0
  %1153 = vmatprep.subr.mxu0 0.0
  %1154 = vmatpush2.msra.mxu0 0.0
  %1155 = vmatprep.mubr.f32.mxu0 0.0
  %1156 = vmatmul.mubr.f32.gmra.mxu0 %v1089
  %v1157 = vpop.f32.mrf.mxu0
  %v1158 = vadd.f32 0.0, %v1157
  %v1159 = vpop.f32.mrf.mxu0
  %1160 = vdwg.mxu0
  %v1161 = vadd.f32 %v221, %v1158
  %v1162 = vxor.u32 %v1161, 2147483648
  %v1163 = vmul.f32 %v1162, 1.442695
  %v1164 = vpow.pop %v1163
  %v1165 = vadd.f32 %v1164, 1.0
  %v1166 = vrcp.pop %v1165
  %v1167 = vmul.f32 1.0, %v1166
  %v1168 = vtanh.pop %v1161
  %v1169 = vmul.f32 %v1167, %v977
  %1171 = vrot.lane.b32.xlu0 %v1168, 64
  %v1172 = vpop.permute.xlu0 %1171
  %v1174 = vmul.f32 %v1167, %v1172
  %1176 = vrot.lane.b32.xlu0 %v1174, 32
  %v1177 = vpop.permute.xlu0 %1176
  %v1179 = vadd.f32 %v1169, %v1177
  %v1180 = vtanh.pop %v1179
  %1182 = vrot.lane.b32.xlu0 %v1180, 64
  %v1183 = vpop.permute.xlu0 %1182
  %v1185 = vmul.f32 %v1167, %v1183
  %v1186 = vadd.f32 %v984, %v1185
  %1188 = vrot.lane.b32.xlu0 %v1084, 32
  %v1189 = vpop.permute.xlu0 %1188
  %v1190 = vsel %vm60, %v1189, 0
  %1192 = vmatprep.subr.mxu0 0.0
  %1193 = vmatpush1.msra.mxu0 0.0
  %1194 = vmatprep.subr.mxu0 0.0
  %1195 = vmatpush1.msra.mxu0 0.0
  %1196 = vmatprep.subr.mxu0 0.0
  %1197 = vmatpush1.msra.mxu0 0.0
  %1198 = vmatprep.subr.mxu0 0.0
  %1199 = vmatpush1.msra.mxu0 0.0
  %1200 = vmatprep.subr.mxu0 0.0
  %1201 = vmatpush1.msra.mxu0 0.0
  %1202 = vmatprep.subr.mxu0 0.0
  %1203 = vmatpush1.msra.mxu0 0.0
  %1204 = vmatprep.subr.mxu0 0.0
  %1205 = vmatpush1.msra.mxu0 0.0
  %1206 = vmatprep.subr.mxu0 0.0
  %1207 = vmatpush1.msra.mxu0 0.0
  %1208 = vmatprep.subr.mxu0 0.0
  %1209 = vmatpush1.msra.mxu0 0.0
  %1210 = vmatprep.subr.mxu0 0.0
  %1211 = vmatpush1.msra.mxu0 0.0
  %1212 = vmatprep.subr.mxu0 0.0
  %1213 = vmatpush1.msra.mxu0 0.0
  %1214 = vmatprep.subr.mxu0 0.0
  %1215 = vmatpush1.msra.mxu0 0.0
  %1216 = vmatprep.subr.mxu0 0.0
  %1217 = vmatpush1.msra.mxu0 %v48
  %1218 = vmatprep.subr.mxu0 0.0
  %1219 = vmatpush1.msra.mxu0 %v47
  %1220 = vmatprep.subr.mxu0 0.0
  %1221 = vmatpush1.msra.mxu0 %v46
  %1222 = vmatprep.subr.mxu0 0.0
  %1223 = vmatpush1.msra.mxu0 %v45
  %1224 = vmatprep.subr.mxu0 0.0
  %1225 = vmatpush2.msra.mxu0 0.0
  %1226 = vmatprep.subr.mxu0 0.0
  %1227 = vmatpush2.msra.mxu0 0.0
  %1228 = vmatprep.subr.mxu0 0.0
  %1229 = vmatpush2.msra.mxu0 0.0
  %1230 = vmatprep.subr.mxu0 0.0
  %1231 = vmatpush2.msra.mxu0 0.0
  %1232 = vmatprep.subr.mxu0 0.0
  %1233 = vmatpush2.msra.mxu0 0.0
  %1234 = vmatprep.subr.mxu0 0.0
  %1235 = vmatpush2.msra.mxu0 0.0
  %1236 = vmatprep.subr.mxu0 0.0
  %1237 = vmatpush2.msra.mxu0 0.0
  %1238 = vmatprep.subr.mxu0 0.0
  %1239 = vmatpush2.msra.mxu0 0.0
  %1240 = vmatprep.subr.mxu0 0.0
  %1241 = vmatpush2.msra.mxu0 0.0
  %1242 = vmatprep.subr.mxu0 0.0
  %1243 = vmatpush2.msra.mxu0 0.0
  %1244 = vmatprep.subr.mxu0 0.0
  %1245 = vmatpush2.msra.mxu0 0.0
  %1246 = vmatprep.subr.mxu0 0.0
  %1247 = vmatpush2.msra.mxu0 0.0
  %1248 = vmatprep.subr.mxu0 0.0
  %1249 = vmatpush2.msra.mxu0 0.0
  %1250 = vmatprep.subr.mxu0 0.0
  %1251 = vmatpush2.msra.mxu0 0.0
  %1252 = vmatprep.subr.mxu0 0.0
  %1253 = vmatpush2.msra.mxu0 0.0
  %1254 = vmatprep.subr.mxu0 0.0
  %1255 = vmatpush2.msra.mxu0 0.0
  %1256 = vmatprep.mubr.f32.mxu0 0.0
  %1257 = vmatmul.mubr.f32.gmra.mxu0 %v1190
  %v1258 = vpop.f32.mrf.mxu0
  %v1259 = vadd.f32 0.0, %v1258
  %v1260 = vpop.f32.mrf.mxu0
  %1261 = vdwg.mxu0
  %v1262 = vadd.f32 %v226, %v1259
  %v1263 = vxor.u32 %v1262, 2147483648
  %v1264 = vmul.f32 %v1263, 1.442695
  %v1265 = vpow.pop %v1264
  %v1266 = vadd.f32 %v1265, 1.0
  %v1267 = vrcp.pop %v1266
  %v1268 = vmul.f32 1.0, %v1267
  %v1269 = vtanh.pop %v1262
  %v1270 = vmul.f32 %v1268, %v1078
  %1272 = vrot.lane.b32.xlu0 %v1269, 64
  %v1273 = vpop.permute.xlu0 %1272
  %v1275 = vmul.f32 %v1268, %v1273
  %1277 = vrot.lane.b32.xlu0 %v1275, 32
  %v1278 = vpop.permute.xlu0 %1277
  %v1280 = vadd.f32 %v1270, %v1278
  %v1281 = vtanh.pop %v1280
  %1283 = vrot.lane.b32.xlu0 %v1281, 64
  %v1284 = vpop.permute.xlu0 %1283
  %v1286 = vmul.f32 %v1268, %v1284
  %v1287 = vadd.f32 %v1085, %v1286
  %1289 = vrot.lane.b32.xlu0 %v1185, 32
  %v1290 = vpop.permute.xlu0 %1289
  %v1291 = vsel %vm60, %v1290, 0
  %1293 = vmatprep.subr.mxu0 0.0
  %1294 = vmatpush1.msra.mxu0 0.0
  %1295 = vmatprep.subr.mxu0 0.0
  %1296 = vmatpush1.msra.mxu0 0.0
  %1297 = vmatprep.subr.mxu0 0.0
  %1298 = vmatpush1.msra.mxu0 0.0
  %1299 = vmatprep.subr.mxu0 0.0
  %1300 = vmatpush1.msra.mxu0 0.0
  %1301 = vmatprep.subr.mxu0 0.0
  %1302 = vmatpush1.msra.mxu0 0.0
  %1303 = vmatprep.subr.mxu0 0.0
  %1304 = vmatpush1.msra.mxu0 0.0
  %1305 = vmatprep.subr.mxu0 0.0
  %1306 = vmatpush1.msra.mxu0 0.0
  %1307 = vmatprep.subr.mxu0 0.0
  %1308 = vmatpush1.msra.mxu0 0.0
  %1309 = vmatprep.subr.mxu0 0.0
  %1310 = vmatpush1.msra.mxu0 0.0
  %1311 = vmatprep.subr.mxu0 0.0
  %1312 = vmatpush1.msra.mxu0 0.0
  %1313 = vmatprep.subr.mxu0 0.0
  %1314 = vmatpush1.msra.mxu0 0.0
  %1315 = vmatprep.subr.mxu0 0.0
  %1316 = vmatpush1.msra.mxu0 0.0
  %1317 = vmatprep.subr.mxu0 0.0
  %1318 = vmatpush1.msra.mxu0 %v48
  %1319 = vmatprep.subr.mxu0 0.0
  %1320 = vmatpush1.msra.mxu0 %v47
  %1321 = vmatprep.subr.mxu0 0.0
  %1322 = vmatpush1.msra.mxu0 %v46
  %1323 = vmatprep.subr.mxu0 0.0
  %1324 = vmatpush1.msra.mxu0 %v45
  %1325 = vmatprep.subr.mxu0 0.0
  %1326 = vmatpush2.msra.mxu0 0.0
  %1327 = vmatprep.subr.mxu0 0.0
  %1328 = vmatpush2.msra.mxu0 0.0
  %1329 = vmatprep.subr.mxu0 0.0
  %1330 = vmatpush2.msra.mxu0 0.0
  %1331 = vmatprep.subr.mxu0 0.0
  %1332 = vmatpush2.msra.mxu0 0.0
  %1333 = vmatprep.subr.mxu0 0.0
  %1334 = vmatpush2.msra.mxu0 0.0
  %1335 = vmatprep.subr.mxu0 0.0
  %1336 = vmatpush2.msra.mxu0 0.0
  %1337 = vmatprep.subr.mxu0 0.0
  %1338 = vmatpush2.msra.mxu0 0.0
  %1339 = vmatprep.subr.mxu0 0.0
  %1340 = vmatpush2.msra.mxu0 0.0
  %1341 = vmatprep.subr.mxu0 0.0
  %1342 = vmatpush2.msra.mxu0 0.0
  %1343 = vmatprep.subr.mxu0 0.0
  %1344 = vmatpush2.msra.mxu0 0.0
  %1345 = vmatprep.subr.mxu0 0.0
  %1346 = vmatpush2.msra.mxu0 0.0
  %1347 = vmatprep.subr.mxu0 0.0
  %1348 = vmatpush2.msra.mxu0 0.0
  %1349 = vmatprep.subr.mxu0 0.0
  %1350 = vmatpush2.msra.mxu0 0.0
  %1351 = vmatprep.subr.mxu0 0.0
  %1352 = vmatpush2.msra.mxu0 0.0
  %1353 = vmatprep.subr.mxu0 0.0
  %1354 = vmatpush2.msra.mxu0 0.0
  %1355 = vmatprep.subr.mxu0 0.0
  %1356 = vmatpush2.msra.mxu0 0.0
  %1357 = vmatprep.mubr.f32.mxu0 0.0
  %1358 = vmatmul.mubr.f32.gmra.mxu0 %v1291
  %v1359 = vpop.f32.mrf.mxu0
  %v1360 = vadd.f32 0.0, %v1359
  %v1361 = vpop.f32.mrf.mxu0
  %1362 = vdwg.mxu0
  %v1363 = vadd.f32 %v231, %v1360
  %v1364 = vxor.u32 %v1363, 2147483648
  %v1365 = vmul.f32 %v1364, 1.442695
  %v1366 = vpow.pop %v1365
  %v1367 = vadd.f32 %v1366, 1.0
  %v1368 = vrcp.pop %v1367
  %v1369 = vmul.f32 1.0, %v1368
  %v1370 = vtanh.pop %v1363
  %v1371 = vmul.f32 %v1369, %v1179
  %1373 = vrot.lane.b32.xlu0 %v1370, 64
  %v1374 = vpop.permute.xlu0 %1373
  %v1376 = vmul.f32 %v1369, %v1374
  %1378 = vrot.lane.b32.xlu0 %v1376, 32
  %v1379 = vpop.permute.xlu0 %1378
  %v1381 = vadd.f32 %v1371, %v1379
  %v1382 = vtanh.pop %v1381
  %1384 = vrot.lane.b32.xlu0 %v1382, 64
  %v1385 = vpop.permute.xlu0 %1384
  %v1387 = vmul.f32 %v1369, %v1385
  %v1388 = vadd.f32 %v1186, %v1387
  %1390 = vrot.lane.b32.xlu0 %v1286, 32
  %v1391 = vpop.permute.xlu0 %1390
  %v1392 = vsel %vm60, %v1391, 0
  %1394 = vmatprep.subr.mxu0 0.0
  %1395 = vmatpush1.msra.mxu0 0.0
  %1396 = vmatprep.subr.mxu0 0.0
  %1397 = vmatpush1.msra.mxu0 0.0
  %1398 = vmatprep.subr.mxu0 0.0
  %1399 = vmatpush1.msra.mxu0 0.0
  %1400 = vmatprep.subr.mxu0 0.0
  %1401 = vmatpush1.msra.mxu0 0.0
  %1402 = vmatprep.subr.mxu0 0.0
  %1403 = vmatpush1.msra.mxu0 0.0
  %1404 = vmatprep.subr.mxu0 0.0
  %1405 = vmatpush1.msra.mxu0 0.0
  %1406 = vmatprep.subr.mxu0 0.0
  %1407 = vmatpush1.msra.mxu0 0.0
  %1408 = vmatprep.subr.mxu0 0.0
  %1409 = vmatpush1.msra.mxu0 0.0
  %1410 = vmatprep.subr.mxu0 0.0
  %1411 = vmatpush1.msra.mxu0 0.0
  %1412 = vmatprep.subr.mxu0 0.0
  %1413 = vmatpush1.msra.mxu0 0.0
  %1414 = vmatprep.subr.mxu0 0.0
  %1415 = vmatpush1.msra.mxu0 0.0
  %1416 = vmatprep.subr.mxu0 0.0
  %1417 = vmatpush1.msra.mxu0 0.0
  %1418 = vmatprep.subr.mxu0 0.0
  %1419 = vmatpush1.msra.mxu0 %v48
  %1420 = vmatprep.subr.mxu0 0.0
  %1421 = vmatpush1.msra.mxu0 %v47
  %1422 = vmatprep.subr.mxu0 0.0
  %1423 = vmatpush1.msra.mxu0 %v46
  %1424 = vmatprep.subr.mxu0 0.0
  %1425 = vmatpush1.msra.mxu0 %v45
  %1426 = vmatprep.subr.mxu0 0.0
  %1427 = vmatpush2.msra.mxu0 0.0
  %1428 = vmatprep.subr.mxu0 0.0
  %1429 = vmatpush2.msra.mxu0 0.0
  %1430 = vmatprep.subr.mxu0 0.0
  %1431 = vmatpush2.msra.mxu0 0.0
  %1432 = vmatprep.subr.mxu0 0.0
  %1433 = vmatpush2.msra.mxu0 0.0
  %1434 = vmatprep.subr.mxu0 0.0
  %1435 = vmatpush2.msra.mxu0 0.0
  %1436 = vmatprep.subr.mxu0 0.0
  %1437 = vmatpush2.msra.mxu0 0.0
  %1438 = vmatprep.subr.mxu0 0.0
  %1439 = vmatpush2.msra.mxu0 0.0
  %1440 = vmatprep.subr.mxu0 0.0
  %1441 = vmatpush2.msra.mxu0 0.0
  %1442 = vmatprep.subr.mxu0 0.0
  %1443 = vmatpush2.msra.mxu0 0.0
  %1444 = vmatprep.subr.mxu0 0.0
  %1445 = vmatpush2.msra.mxu0 0.0
  %1446 = vmatprep.subr.mxu0 0.0
  %1447 = vmatpush2.msra.mxu0 0.0
  %1448 = vmatprep.subr.mxu0 0.0
  %1449 = vmatpush2.msra.mxu0 0.0
  %1450 = vmatprep.subr.mxu0 0.0
  %1451 = vmatpush2.msra.mxu0 0.0
  %1452 = vmatprep.subr.mxu0 0.0
  %1453 = vmatpush2.msra.mxu0 0.0
  %1454 = vmatprep.subr.mxu0 0.0
  %1455 = vmatpush2.msra.mxu0 0.0
  %1456 = vmatprep.subr.mxu0 0.0
  %1457 = vmatpush2.msra.mxu0 0.0
  %1458 = vmatprep.mubr.f32.mxu0 0.0
  %1459 = vmatmul.mubr.f32.gmra.mxu0 %v1392
  %v1460 = vpop.f32.mrf.mxu0
  %v1461 = vadd.f32 0.0, %v1460
  %v1462 = vpop.f32.mrf.mxu0
  %1463 = vdwg.mxu0
  %v1464 = vadd.f32 %v236, %v1461
  %v1465 = vxor.u32 %v1464, 2147483648
  %v1466 = vmul.f32 %v1465, 1.442695
  %v1467 = vpow.pop %v1466
  %v1468 = vadd.f32 %v1467, 1.0
  %v1469 = vrcp.pop %v1468
  %v1470 = vmul.f32 1.0, %v1469
  %v1471 = vtanh.pop %v1464
  %v1472 = vmul.f32 %v1470, %v1280
  %1474 = vrot.lane.b32.xlu0 %v1471, 64
  %v1475 = vpop.permute.xlu0 %1474
  %v1477 = vmul.f32 %v1470, %v1475
  %1479 = vrot.lane.b32.xlu0 %v1477, 32
  %v1480 = vpop.permute.xlu0 %1479
  %v1482 = vadd.f32 %v1472, %v1480
  %v1483 = vtanh.pop %v1482
  %1485 = vrot.lane.b32.xlu0 %v1483, 64
  %v1486 = vpop.permute.xlu0 %1485
  %v1488 = vmul.f32 %v1470, %v1486
  %v1489 = vadd.f32 %v1287, %v1488
  %1491 = vrot.lane.b32.xlu0 %v1387, 32
  %v1492 = vpop.permute.xlu0 %1491
  %v1493 = vsel %vm60, %v1492, 0
  %1495 = vmatprep.subr.mxu0 0.0
  %1496 = vmatpush1.msra.mxu0 0.0
  %1497 = vmatprep.subr.mxu0 0.0
  %1498 = vmatpush1.msra.mxu0 0.0
  %1499 = vmatprep.subr.mxu0 0.0
  %1500 = vmatpush1.msra.mxu0 0.0
  %1501 = vmatprep.subr.mxu0 0.0
  %1502 = vmatpush1.msra.mxu0 0.0
  %1503 = vmatprep.subr.mxu0 0.0
  %1504 = vmatpush1.msra.mxu0 0.0
  %1505 = vmatprep.subr.mxu0 0.0
  %1506 = vmatpush1.msra.mxu0 0.0
  %1507 = vmatprep.subr.mxu0 0.0
  %1508 = vmatpush1.msra.mxu0 0.0
  %1509 = vmatprep.subr.mxu0 0.0
  %1510 = vmatpush1.msra.mxu0 0.0
  %1511 = vmatprep.subr.mxu0 0.0
  %1512 = vmatpush1.msra.mxu0 0.0
  %1513 = vmatprep.subr.mxu0 0.0
  %1514 = vmatpush1.msra.mxu0 0.0
  %1515 = vmatprep.subr.mxu0 0.0
  %1516 = vmatpush1.msra.mxu0 0.0
  %1517 = vmatprep.subr.mxu0 0.0
  %1518 = vmatpush1.msra.mxu0 0.0
  %1519 = vmatprep.subr.mxu0 0.0
  %1520 = vmatpush1.msra.mxu0 %v48
  %1521 = vmatprep.subr.mxu0 0.0
  %1522 = vmatpush1.msra.mxu0 %v47
  %1523 = vmatprep.subr.mxu0 0.0
  %1524 = vmatpush1.msra.mxu0 %v46
  %1525 = vmatprep.subr.mxu0 0.0
  %1526 = vmatpush1.msra.mxu0 %v45
  %1527 = vmatprep.subr.mxu0 0.0
  %1528 = vmatpush2.msra.mxu0 0.0
  %1529 = vmatprep.subr.mxu0 0.0
  %1530 = vmatpush2.msra.mxu0 0.0
  %1531 = vmatprep.subr.mxu0 0.0
  %1532 = vmatpush2.msra.mxu0 0.0
  %1533 = vmatprep.subr.mxu0 0.0
  %1534 = vmatpush2.msra.mxu0 0.0
  %1535 = vmatprep.subr.mxu0 0.0
  %1536 = vmatpush2.msra.mxu0 0.0
  %1537 = vmatprep.subr.mxu0 0.0
  %1538 = vmatpush2.msra.mxu0 0.0
  %1539 = vmatprep.subr.mxu0 0.0
  %1540 = vmatpush2.msra.mxu0 0.0
  %1541 = vmatprep.subr.mxu0 0.0
  %1542 = vmatpush2.msra.mxu0 0.0
  %1543 = vmatprep.subr.mxu0 0.0
  %1544 = vmatpush2.msra.mxu0 0.0
  %1545 = vmatprep.subr.mxu0 0.0
  %1546 = vmatpush2.msra.mxu0 0.0
  %1547 = vmatprep.subr.mxu0 0.0
  %1548 = vmatpush2.msra.mxu0 0.0
  %1549 = vmatprep.subr.mxu0 0.0
  %1550 = vmatpush2.msra.mxu0 0.0
  %1551 = vmatprep.subr.mxu0 0.0
  %1552 = vmatpush2.msra.mxu0 0.0
  %1553 = vmatprep.subr.mxu0 0.0
  %1554 = vmatpush2.msra.mxu0 0.0
  %1555 = vmatprep.subr.mxu0 0.0
  %1556 = vmatpush2.msra.mxu0 0.0
  %1557 = vmatprep.subr.mxu0 0.0
  %1558 = vmatpush2.msra.mxu0 0.0
  %1559 = vmatprep.mubr.f32.mxu0 0.0
  %1560 = vmatmul.mubr.f32.gmra.mxu0 %v1493
  %v1561 = vpop.f32.mrf.mxu0
  %v1562 = vadd.f32 0.0, %v1561
  %v1563 = vpop.f32.mrf.mxu0
  %1564 = vdwg.mxu0
  %v1565 = vadd.f32 %v241, %v1562
  %v1566 = vxor.u32 %v1565, 2147483648
  %v1567 = vmul.f32 %v1566, 1.442695
  %v1568 = vpow.pop %v1567
  %v1569 = vadd.f32 %v1568, 1.0
  %v1570 = vrcp.pop %v1569
  %v1571 = vmul.f32 1.0, %v1570
  %v1572 = vtanh.pop %v1565
  %v1573 = vmul.f32 %v1571, %v1381
  %1575 = vrot.lane.b32.xlu0 %v1572, 64
  %v1576 = vpop.permute.xlu0 %1575
  %v1578 = vmul.f32 %v1571, %v1576
  %1580 = vrot.lane.b32.xlu0 %v1578, 32
  %v1581 = vpop.permute.xlu0 %1580
  %v1583 = vadd.f32 %v1573, %v1581
  %v1584 = vtanh.pop %v1583
  %1586 = vrot.lane.b32.xlu0 %v1584, 64
  %v1587 = vpop.permute.xlu0 %1586
  %v1589 = vmul.f32 %v1571, %v1587
  %v1590 = vadd.f32 %v1388, %v1589
  %1592 = vrot.lane.b32.xlu0 %v1488, 32
  %v1593 = vpop.permute.xlu0 %1592
  %v1594 = vsel %vm60, %v1593, 0
  %1596 = vmatprep.subr.mxu0 0.0
  %1597 = vmatpush1.msra.mxu0 0.0
  %1598 = vmatprep.subr.mxu0 0.0
  %1599 = vmatpush1.msra.mxu0 0.0
  %1600 = vmatprep.subr.mxu0 0.0
  %1601 = vmatpush1.msra.mxu0 0.0
  %1602 = vmatprep.subr.mxu0 0.0
  %1603 = vmatpush1.msra.mxu0 0.0
  %1604 = vmatprep.subr.mxu0 0.0
  %1605 = vmatpush1.msra.mxu0 0.0
  %1606 = vmatprep.subr.mxu0 0.0
  %1607 = vmatpush1.msra.mxu0 0.0
  %1608 = vmatprep.subr.mxu0 0.0
  %1609 = vmatpush1.msra.mxu0 0.0
  %1610 = vmatprep.subr.mxu0 0.0
  %1611 = vmatpush1.msra.mxu0 0.0
  %1612 = vmatprep.subr.mxu0 0.0
  %1613 = vmatpush1.msra.mxu0 0.0
  %1614 = vmatprep.subr.mxu0 0.0
  %1615 = vmatpush1.msra.mxu0 0.0
  %1616 = vmatprep.subr.mxu0 0.0
  %1617 = vmatpush1.msra.mxu0 0.0
  %1618 = vmatprep.subr.mxu0 0.0
  %1619 = vmatpush1.msra.mxu0 0.0
  %1620 = vmatprep.subr.mxu0 0.0
  %1621 = vmatpush1.msra.mxu0 %v48
  %1622 = vmatprep.subr.mxu0 0.0
  %1623 = vmatpush1.msra.mxu0 %v47
  %1624 = vmatprep.subr.mxu0 0.0
  %1625 = vmatpush1.msra.mxu0 %v46
  %1626 = vmatprep.subr.mxu0 0.0
  %1627 = vmatpush1.msra.mxu0 %v45
  %1628 = vmatprep.subr.mxu0 0.0
  %1629 = vmatpush2.msra.mxu0 0.0
  %1630 = vmatprep.subr.mxu0 0.0
  %1631 = vmatpush2.msra.mxu0 0.0
  %1632 = vmatprep.subr.mxu0 0.0
  %1633 = vmatpush2.msra.mxu0 0.0
  %1634 = vmatprep.subr.mxu0 0.0
  %1635 = vmatpush2.msra.mxu0 0.0
  %1636 = vmatprep.subr.mxu0 0.0
  %1637 = vmatpush2.msra.mxu0 0.0
  %1638 = vmatprep.subr.mxu0 0.0
  %1639 = vmatpush2.msra.mxu0 0.0
  %1640 = vmatprep.subr.mxu0 0.0
  %1641 = vmatpush2.msra.mxu0 0.0
  %1642 = vmatprep.subr.mxu0 0.0
  %1643 = vmatpush2.msra.mxu0 0.0
  %1644 = vmatprep.subr.mxu0 0.0
  %1645 = vmatpush2.msra.mxu0 0.0
  %1646 = vmatprep.subr.mxu0 0.0
  %1647 = vmatpush2.msra.mxu0 0.0
  %1648 = vmatprep.subr.mxu0 0.0
  %1649 = vmatpush2.msra.mxu0 0.0
  %1650 = vmatprep.subr.mxu0 0.0
  %1651 = vmatpush2.msra.mxu0 0.0
  %1652 = vmatprep.subr.mxu0 0.0
  %1653 = vmatpush2.msra.mxu0 0.0
  %1654 = vmatprep.subr.mxu0 0.0
  %1655 = vmatpush2.msra.mxu0 0.0
  %1656 = vmatprep.subr.mxu0 0.0
  %1657 = vmatpush2.msra.mxu0 0.0
  %1658 = vmatprep.subr.mxu0 0.0
  %1659 = vmatpush2.msra.mxu0 0.0
  %1660 = vmatprep.mubr.f32.mxu0 0.0
  %1661 = vmatmul.mubr.f32.gmra.mxu0 %v1594
  %v1662 = vpop.f32.mrf.mxu0
  %v1663 = vadd.f32 0.0, %v1662
  %v1664 = vpop.f32.mrf.mxu0
  %1665 = vdwg.mxu0
  %v1666 = vadd.f32 %v246, %v1663
  %v1667 = vxor.u32 %v1666, 2147483648
  %v1668 = vmul.f32 %v1667, 1.442695
  %v1669 = vpow.pop %v1668
  %v1670 = vadd.f32 %v1669, 1.0
  %v1671 = vrcp.pop %v1670
  %v1672 = vmul.f32 1.0, %v1671
  %v1673 = vtanh.pop %v1666
  %v1674 = vmul.f32 %v1672, %v1482
  %1676 = vrot.lane.b32.xlu0 %v1673, 64
  %v1677 = vpop.permute.xlu0 %1676
  %v1679 = vmul.f32 %v1672, %v1677
  %1681 = vrot.lane.b32.xlu0 %v1679, 32
  %v1682 = vpop.permute.xlu0 %1681
  %v1684 = vadd.f32 %v1674, %v1682
  %v1685 = vtanh.pop %v1684
  %1687 = vrot.lane.b32.xlu0 %v1685, 64
  %v1688 = vpop.permute.xlu0 %1687
  %v1690 = vmul.f32 %v1672, %v1688
  %v1691 = vadd.f32 %v1489, %v1690
  %1693 = vrot.lane.b32.xlu0 %v1589, 32
  %v1694 = vpop.permute.xlu0 %1693
  %v1695 = vsel %vm60, %v1694, 0
  %1697 = vmatprep.subr.mxu0 0.0
  %1698 = vmatpush1.msra.mxu0 0.0
  %1699 = vmatprep.subr.mxu0 0.0
  %1700 = vmatpush1.msra.mxu0 0.0
  %1701 = vmatprep.subr.mxu0 0.0
  %1702 = vmatpush1.msra.mxu0 0.0
  %1703 = vmatprep.subr.mxu0 0.0
  %1704 = vmatpush1.msra.mxu0 0.0
  %1705 = vmatprep.subr.mxu0 0.0
  %1706 = vmatpush1.msra.mxu0 0.0
  %1707 = vmatprep.subr.mxu0 0.0
  %1708 = vmatpush1.msra.mxu0 0.0
  %1709 = vmatprep.subr.mxu0 0.0
  %1710 = vmatpush1.msra.mxu0 0.0
  %1711 = vmatprep.subr.mxu0 0.0
  %1712 = vmatpush1.msra.mxu0 0.0
  %1713 = vmatprep.subr.mxu0 0.0
  %1714 = vmatpush1.msra.mxu0 0.0
  %1715 = vmatprep.subr.mxu0 0.0
  %1716 = vmatpush1.msra.mxu0 0.0
  %1717 = vmatprep.subr.mxu0 0.0
  %1718 = vmatpush1.msra.mxu0 0.0
  %1719 = vmatprep.subr.mxu0 0.0
  %1720 = vmatpush1.msra.mxu0 0.0
  %1721 = vmatprep.subr.mxu0 0.0
  %1722 = vmatpush1.msra.mxu0 %v48
  %1723 = vmatprep.subr.mxu0 0.0
  %1724 = vmatpush1.msra.mxu0 %v47
  %1725 = vmatprep.subr.mxu0 0.0
  %1726 = vmatpush1.msra.mxu0 %v46
  %1727 = vmatprep.subr.mxu0 0.0
  %1728 = vmatpush1.msra.mxu0 %v45
  %1729 = vmatprep.subr.mxu0 0.0
  %1730 = vmatpush2.msra.mxu0 0.0
  %1731 = vmatprep.subr.mxu0 0.0
  %1732 = vmatpush2.msra.mxu0 0.0
  %1733 = vmatprep.subr.mxu0 0.0
  %1734 = vmatpush2.msra.mxu0 0.0
  %1735 = vmatprep.subr.mxu0 0.0
  %1736 = vmatpush2.msra.mxu0 0.0
  %1737 = vmatprep.subr.mxu0 0.0
  %1738 = vmatpush2.msra.mxu0 0.0
  %1739 = vmatprep.subr.mxu0 0.0
  %1740 = vmatpush2.msra.mxu0 0.0
  %1741 = vmatprep.subr.mxu0 0.0
  %1742 = vmatpush2.msra.mxu0 0.0
  %1743 = vmatprep.subr.mxu0 0.0
  %1744 = vmatpush2.msra.mxu0 0.0
  %1745 = vmatprep.subr.mxu0 0.0
  %1746 = vmatpush2.msra.mxu0 0.0
  %1747 = vmatprep.subr.mxu0 0.0
  %1748 = vmatpush2.msra.mxu0 0.0
  %1749 = vmatprep.subr.mxu0 0.0
  %1750 = vmatpush2.msra.mxu0 0.0
  %1751 = vmatprep.subr.mxu0 0.0
  %1752 = vmatpush2.msra.mxu0 0.0
  %1753 = vmatprep.subr.mxu0 0.0
  %1754 = vmatpush2.msra.mxu0 0.0
  %1755 = vmatprep.subr.mxu0 0.0
  %1756 = vmatpush2.msra.mxu0 0.0
  %1757 = vmatprep.subr.mxu0 0.0
  %1758 = vmatpush2.msra.mxu0 0.0
  %1759 = vmatprep.subr.mxu0 0.0
  %1760 = vmatpush2.msra.mxu0 0.0
  %1761 = vmatprep.mubr.f32.mxu0 0.0
  %1762 = vmatmul.mubr.f32.gmra.mxu0 %v1695
  %v1763 = vpop.f32.mrf.mxu0
  %v1764 = vadd.f32 0.0, %v1763
  %v1765 = vpop.f32.mrf.mxu0
  %1766 = vdwg.mxu0
  %v1767 = vadd.f32 %v251, %v1764
  %v1768 = vxor.u32 %v1767, 2147483648
  %v1769 = vmul.f32 %v1768, 1.442695
  %v1770 = vpow.pop %v1769
  %v1771 = vadd.f32 %v1770, 1.0
  %v1772 = vrcp.pop %v1771
  %v1773 = vmul.f32 1.0, %v1772
  %v1774 = vtanh.pop %v1767
  %v1775 = vmul.f32 %v1773, %v1583
  %1777 = vrot.lane.b32.xlu0 %v1774, 64
  %v1778 = vpop.permute.xlu0 %1777
  %v1780 = vmul.f32 %v1773, %v1778
  %1782 = vrot.lane.b32.xlu0 %v1780, 32
  %v1783 = vpop.permute.xlu0 %1782
  %v1785 = vadd.f32 %v1775, %v1783
  %v1786 = vtanh.pop %v1785
  %1788 = vrot.lane.b32.xlu0 %v1786, 64
  %v1789 = vpop.permute.xlu0 %1788
  %v1791 = vmul.f32 %v1773, %v1789
  %v1792 = vadd.f32 %v1590, %v1791
  %v1793 = vld [vmem:[%s4] sm:$0xff]
  %v1794 = vld [vmem:[%s4 + $0x8] sm:$0xff]
  %v1795 = vld [vmem:[%s4 + $0x10] sm:$0xff]
  %v1796 = vld [vmem:[%s4 + $0x18] sm:$0xff]
  %v1797 = vld [vmem:[%s5] sm:$0x1]
  %v1799 = vlaneseq
  %v1800 = vshrl.u32 %v1799, 7
  %v1801 = vsub.s32 0, %v1800
  %v1802 = vrot.slane %v1797, %v1801
  %1806 = vrot.lane.b32.xlu0 %v1691, 32
  %v1807 = vpop.permute.xlu0 %1806
  %1808 = vrot.lane.b32.xlu0 %v1792, 32
  %v1809 = vpop.permute.xlu0 %1808
  %v1810 = vsel %vm60, %v1807, 0
  %v1812 = vsel %vm60, %v1809, 0
  %1814 = vmatprep.subr.mxu0 0.0
  %1815 = vmatpush1.msra.mxu0 0.0
  %1816 = vmatprep.subr.mxu0 0.0
  %1817 = vmatpush1.msra.mxu0 0.0
  %1818 = vmatprep.subr.mxu0 0.0
  %1819 = vmatpush1.msra.mxu0 0.0
  %1820 = vmatprep.subr.mxu0 0.0
  %1821 = vmatpush1.msra.mxu0 0.0
  %1822 = vmatprep.subr.mxu0 0.0
  %1823 = vmatpush1.msra.mxu0 0.0
  %1824 = vmatprep.subr.mxu0 0.0
  %1825 = vmatpush1.msra.mxu0 0.0
  %1826 = vmatprep.subr.mxu0 0.0
  %1827 = vmatpush1.msra.mxu0 0.0
  %1828 = vmatprep.subr.mxu0 0.0
  %1829 = vmatpush1.msra.mxu0 0.0
  %1830 = vmatprep.subr.mxu0 0.0
  %1831 = vmatpush1.msra.mxu0 0.0
  %1832 = vmatprep.subr.mxu0 0.0
  %1833 = vmatpush1.msra.mxu0 0.0
  %1834 = vmatprep.subr.mxu0 0.0
  %1835 = vmatpush1.msra.mxu0 0.0
  %1836 = vmatprep.subr.mxu0 0.0
  %1837 = vmatpush1.msra.mxu0 0.0
  %1838 = vmatprep.subr.mxu0 0.0
  %1839 = vmatpush1.msra.mxu0 %v1796
  %1840 = vmatprep.subr.mxu0 0.0
  %1841 = vmatpush1.msra.mxu0 %v1795
  %1842 = vmatprep.subr.mxu0 0.0
  %1843 = vmatpush1.msra.mxu0 %v1794
  %1844 = vmatprep.subr.mxu0 0.0
  %1845 = vmatpush1.msra.mxu0 %v1793
  %1846 = vmatprep.subr.mxu0 0.0
  %1847 = vmatpush2.msra.mxu0 0.0
  %1848 = vmatprep.subr.mxu0 0.0
  %1849 = vmatpush2.msra.mxu0 0.0
  %1850 = vmatprep.subr.mxu0 0.0
  %1851 = vmatpush2.msra.mxu0 0.0
  %1852 = vmatprep.subr.mxu0 0.0
  %1853 = vmatpush2.msra.mxu0 0.0
  %1854 = vmatprep.subr.mxu0 0.0
  %1855 = vmatpush2.msra.mxu0 0.0
  %1856 = vmatprep.subr.mxu0 0.0
  %1857 = vmatpush2.msra.mxu0 0.0
  %1858 = vmatprep.subr.mxu0 0.0
  %1859 = vmatpush2.msra.mxu0 0.0
  %1860 = vmatprep.subr.mxu0 0.0
  %1861 = vmatpush2.msra.mxu0 0.0
  %1862 = vmatprep.subr.mxu0 0.0
  %1863 = vmatpush2.msra.mxu0 0.0
  %1864 = vmatprep.subr.mxu0 0.0
  %1865 = vmatpush2.msra.mxu0 0.0
  %1866 = vmatprep.subr.mxu0 0.0
  %1867 = vmatpush2.msra.mxu0 0.0
  %1868 = vmatprep.subr.mxu0 0.0
  %1869 = vmatpush2.msra.mxu0 0.0
  %1870 = vmatprep.subr.mxu0 0.0
  %1871 = vmatpush2.msra.mxu0 0.0
  %1872 = vmatprep.subr.mxu0 0.0
  %1873 = vmatpush2.msra.mxu0 0.0
  %1874 = vmatprep.subr.mxu0 0.0
  %1875 = vmatpush2.msra.mxu0 0.0
  %1876 = vmatprep.subr.mxu0 0.0
  %1877 = vmatpush2.msra.mxu0 0.0
  %1878 = vmatprep.mubr.f32.mxu0 0.0
  %1879 = vmatmul.mubr.f32.gmra.mxu0 %v1810
  %v1880 = vpop.f32.mrf.mxu0
  %v1881 = vadd.f32 %v1802, %v1880
  %v1882 = vpop.f32.mrf.mxu0
  %1883 = vmatprep.mubr.f32.mxu0 0.0
  %1884 = vmatmul.mubr.f32.gmra.mxu0 %v1812
  %v1885 = vpop.f32.mrf.mxu0
  %v1886 = vadd.f32 %v1802, %v1885
  %v1887 = vpop.f32.mrf.mxu0
  %1888 = vdwg.mxu0
  %v1889 = vmax.f32 %v1881, 0.0
  %v1890 = vmax.f32 %v1886, 0.0
  %v1891 = vld [vmem:[%s6] sm:$0xff]
  %v1892 = vld [vmem:[%s6 + $0x8] sm:$0xff]
  %v1893 = vld [vmem:[%s7] sm:$0x1]
  %v1895 = vlaneseq
  %v1896 = vshrl.u32 %v1895, 7
  %v1897 = vsub.s32 0, %v1896
  %v1898 = vrot.slane %v1893, %v1897
  %vm1900 = vcmask 130048
  %v1902 = vsel %vm1900, %v1889, 0
  %v1905 = vsel %vm1900, %v1890, 0
  %1907 = vmatprep.subr.mxu0 0.0
  %1908 = vmatpush1.msra.mxu0 0.0
  %1909 = vmatprep.subr.mxu0 0.0
  %1910 = vmatpush1.msra.mxu0 0.0
  %1911 = vmatprep.subr.mxu0 0.0
  %1912 = vmatpush1.msra.mxu0 0.0
  %1913 = vmatprep.subr.mxu0 0.0
  %1914 = vmatpush1.msra.mxu0 0.0
  %1915 = vmatprep.subr.mxu0 0.0
  %1916 = vmatpush1.msra.mxu0 0.0
  %1917 = vmatprep.subr.mxu0 0.0
  %1918 = vmatpush1.msra.mxu0 0.0
  %1919 = vmatprep.subr.mxu0 0.0
  %1920 = vmatpush1.msra.mxu0 0.0
  %1921 = vmatprep.subr.mxu0 0.0
  %1922 = vmatpush1.msra.mxu0 0.0
  %1923 = vmatprep.subr.mxu0 0.0
  %1924 = vmatpush1.msra.mxu0 0.0
  %1925 = vmatprep.subr.mxu0 0.0
  %1926 = vmatpush1.msra.mxu0 0.0
  %1927 = vmatprep.subr.mxu0 0.0
  %1928 = vmatpush1.msra.mxu0 0.0
  %1929 = vmatprep.subr.mxu0 0.0
  %1930 = vmatpush1.msra.mxu0 0.0
  %1931 = vmatprep.subr.mxu0 0.0
  %1932 = vmatpush1.msra.mxu0 0.0
  %1933 = vmatprep.subr.mxu0 0.0
  %1934 = vmatpush1.msra.mxu0 0.0
  %1935 = vmatprep.subr.mxu0 0.0
  %1936 = vmatpush1.msra.mxu0 %v1892
  %1937 = vmatprep.subr.mxu0 0.0
  %1938 = vmatpush1.msra.mxu0 %v1891
  %1939 = vmatprep.subr.mxu0 0.0
  %1940 = vmatpush2.msra.mxu0 0.0
  %1941 = vmatprep.subr.mxu0 0.0
  %1942 = vmatpush2.msra.mxu0 0.0
  %1943 = vmatprep.subr.mxu0 0.0
  %1944 = vmatpush2.msra.mxu0 0.0
  %1945 = vmatprep.subr.mxu0 0.0
  %1946 = vmatpush2.msra.mxu0 0.0
  %1947 = vmatprep.subr.mxu0 0.0
  %1948 = vmatpush2.msra.mxu0 0.0
  %1949 = vmatprep.subr.mxu0 0.0
  %1950 = vmatpush2.msra.mxu0 0.0
  %1951 = vmatprep.subr.mxu0 0.0
  %1952 = vmatpush2.msra.mxu0 0.0
  %1953 = vmatprep.subr.mxu0 0.0
  %1954 = vmatpush2.msra.mxu0 0.0
  %1955 = vmatprep.subr.mxu0 0.0
  %1956 = vmatpush2.msra.mxu0 0.0
  %1957 = vmatprep.subr.mxu0 0.0
  %1958 = vmatpush2.msra.mxu0 0.0
  %1959 = vmatprep.subr.mxu0 0.0
  %1960 = vmatpush2.msra.mxu0 0.0
  %1961 = vmatprep.subr.mxu0 0.0
  %1962 = vmatpush2.msra.mxu0 0.0
  %1963 = vmatprep.subr.mxu0 0.0
  %1964 = vmatpush2.msra.mxu0 0.0
  %1965 = vmatprep.subr.mxu0 0.0
  %1966 = vmatpush2.msra.mxu0 0.0
  %1967 = vmatprep.subr.mxu0 0.0
  %1968 = vmatpush2.msra.mxu0 0.0
  %1969 = vmatprep.subr.mxu0 0.0
  %1970 = vmatpush2.msra.mxu0 0.0
  %1971 = vmatprep.mubr.f32.mxu0 0.0
  %1972 = vmatmul.mubr.f32.gmra.mxu0 %v1902
  %v1973 = vpop.f32.mrf.mxu0
  %v1974 = vadd.f32 %v1898, %v1973
  %v1975 = vpop.f32.mrf.mxu0
  %1976 = vmatprep.mubr.f32.mxu0 0.0
  %1977 = vmatmul.mubr.f32.gmra.mxu0 %v1905
  %v1978 = vpop.f32.mrf.mxu0
  %v1979 = vadd.f32 %v1898, %v1978
  %v1980 = vpop.f32.mrf.mxu0
  %1981 = vdwg.mxu0
  %vm1982 = vcmask 31744
  %v1983 = vsel %vm1982, %v1974, -inf
  %1984 = vmax.xlane.f32.xlu0 %v1983
  %v1985 = vpop.xlane.xlu0 %1984
  %v1986 = vsel %vm1982, %v1979, -inf
  %1987 = vmax.xlane.f32.xlu0 %v1986
  %v1988 = vpop.xlane.xlu0 %1987
  %v1989 = vsub.f32 %v1974, %v1985
  %v1990 = vsub.f32 %v1979, %v1988
  %v1991 = vmul.f32 %v1989, 1.442695
  %v1992 = vpow.pop %v1991
  %v1993 = vmul.f32 %v1990, 1.442695
  %v1994 = vpow.pop %v1993
  %v1995 = vsel %vm1982, %v1992, 0.0
  %1996 = vadd.xlane.f32.xlu0 %v1995
  %v1997 = vpop.xlane.xlu0 %1996
  %v1998 = vsel %vm1982, %v1994, 0.0
  %1999 = vadd.xlane.f32.xlu0 %v1998
  %v2000 = vpop.xlane.xlu0 %1999
  %v2001 = vlog2.pop %v1997
  %v2002 = vmul.f32 %v2001, 0.6931472
  %v2003 = vlog2.pop %v2000
  %v2004 = vmul.f32 %v2003, 0.6931472
  %v2005 = vsub.f32 %v1989, %v2002
  %v2006 = vsub.f32 %v1990, %v2004
  %2007 = vst.msk [vmem:[%s8] sm:$0xff] %vm1982, %v2005
  %2008 = vst.msk [vmem:[%s8 + $0x8] sm:$0xff] %vm1982, %v2006
  // Predicated region
  $region34: #{_forward_jit.1} parent=0 // pred_check
    _
  $region35: #{_forward_jit.1} parent=0 // pred_check_branch
    %2010 = sbr.rel (0) target = $region37
  $region36: #{_forward_jit.1} parent=0 // pred_region
    _
  $region37: #{_forward_jit.1} parent=0 // pred_fallthru
    _
  // Predicated region
  $region38: #{_forward_jit.1} parent=0 // pred_check
    _
  $region39: #{_forward_jit.1} parent=0 // pred_check_branch
    %2012 = sbr.rel (0) target = $region41
  $region40: #{_forward_jit.1} parent=0 // pred_region
    _
  $region41: #{_forward_jit.1} parent=0 // pred_fallthru
    _

</llo_original>
